<compile_context>
chip_gen: v7x
topology: tpu7x:2x2x1
jax: 0.10.0
libtpu: 0.0.40
codegen_flags: <defaults>
</compile_context>

<pallas_src>
import jax
import jax.numpy as jnp
from jax import lax
from jax.experimental import pallas as pl
from jax.experimental.pallas import tpu as pltpu


def _round_up(x, m):
    return (x + m - 1) // m * m


def _pad_axis(x, axis, target):
    pad = target - x.shape[axis]
    if pad == 0:
        return x
    widths = [(0, 0)] * x.ndim
    widths[axis] = (0, pad)
    return jnp.pad(x, widths)


def char_decoder_kernel(x_ref, h0_ref, c0_ref, wih_ref, whh_ref, b_ref, wout_ref,
                        scores_ref, hlast_ref, clast_ref,
                        gx_sc, hall_sc):
    """Single grid point; everything VMEM-resident.

    x_ref:    (L*Bp, Ep)   embedded chars, all time steps flattened
    h0_ref:   (Bp, H)      initial hidden
    c0_ref:   (Bp, H)      initial cell
    wih_ref:  (Ep, Gp)     input->gates weight (transposed, i/f/o cols pre-scaled by 0.5)
    whh_ref:  (H, Gp)      hidden->gates weight (transposed, i/f/o cols pre-scaled by 0.5)
    b_ref:    (1, Gp)      combined bias (b_ih + b_hh, i/f/o pre-scaled by 0.5)
    wout_ref: (H, Vp)      output projection (transposed, no bias)
    scores_ref: (L*Bp, Vp) logits for all time steps (lane-dense)
    hlast_ref/clast_ref: (Bp, H) final LSTM state
    gx_sc:    (L*Bp, Gp)   precomputed input-projection scratch
    hall_sc:  (L*Bp, H)    hidden states of all time steps
    """
    Bp, H = h0_ref.shape
    Gp = whh_ref.shape[1]                       # padded packed gate axis (>= 4*H)
    L = hall_sc.shape[0] // Bp

    # (1) Input projection + bias for every time step: ONE MXU matmul, off the
    #     serial critical path.
    gx_sc[...] = (jnp.dot(x_ref[...], wih_ref[...],
                          preferred_element_type=jnp.float32)
                  + b_ref[...])

    # Lane-index mask for the g (cell-candidate) gate block; hoisted out of the
    # time loop (broadcasts are not CSE'd by JAX).
    lane = lax.broadcasted_iota(jnp.int32, (Bp, Gp), 1)
    is_g = (lane >= 2 * H) & (lane < 3 * H)

    # (2) Sequential LSTM recurrence.  h/c carried in registers; L is small and
    #     static so a static unroll is fine.  whh is only (H, Gp) = 4 vregs at
    #     H=32 -> safe (and free) to hoist as a value.
    # TODO(synk): at larger L, keep W_hh resident in the MXU across all steps
    # via pltpu.matmul_push_rhs / matmul_acc_lhs / matmul_pop instead of jnp.dot
    # (pop semantics differ between MRF on v5e/v6e and MRB on v7x).
    h = h0_ref[...]
    c = c0_ref[...]
    whh = whh_ref[...]
    for t in range(L):
        r0 = t * Bp
        gates = (gx_sc[pl.ds(r0, Bp), :]
                 + jnp.dot(h, whh, preferred_element_type=jnp.float32))
        # i/f/o pre-activations arrive already scaled by 0.5, so a single tanh
        # over the packed (Bp, Gp) vreg yields sigmoid for i/f/o (via
        # 0.5*(tanh(z/2)+1)) and tanh for g, selected by the lane mask.
        th = jnp.tanh(gates)
        act = jnp.where(is_g, th, 0.5 * (th + 1.0))
        # PyTorch gate order i, f, g, o; each block is H lanes wide.
        i = act[:, 0 * H:1 * H]
        f = act[:, 1 * H:2 * H]
        g = act[:, 2 * H:3 * H]
        o = act[:, 3 * H:4 * H]
        c = f * c + i * g
        h = o * jnp.tanh(c)
        hall_sc[pl.ds(r0, Bp), :] = h

    hlast_ref[...] = h
    clast_ref[...] = c

    # (3) Vocab projection over all time steps at once: one MXU matmul with a
    #     lane-dense (Vp multiple of 128) contiguous store.
    scores_ref[...] = jnp.dot(hall_sc[...].astype(wout_ref.dtype), wout_ref[...],
                              preferred_element_type=jnp.float32)


def char_decoder_forward(input_ids, params, dec_hidden=None, *,
                         use_bf16_projections=False):
    """Pallas-backed equivalent of CharDecoder.forward.

    input_ids: (L, B) int32 character ids
    returns: scores (L, B, V), (last_hidden (1,B,H), last_cell (1,B,H))
    """
    emb, w_ih_t, w_hh_t, b, w_out_t = (params["emb"], params["w_ih_t"],
                                       params["w_hh_t"], params["b"],
                                       params["w_out_t"])
    L, B = input_ids.shape
    E = emb.shape[1]
    H = w_hh_t.shape[0]
    V = w_out_t.shape[1]

    Bp = _round_up(max(B, 8), 8)       # full sublane group
    Ep = _round_up(E, 8)               # full sublane groups on the entry K dim
    G = 4 * H                          # packed gate axis (no per-gate padding)
    Gp = _round_up(G, 128)             # pad the packed gate axis as a whole
    Vp = _round_up(V, 128)             # lane-dense scores store

    # Embedding lookup is glue (data-dependent gather) — done in plain JAX.
    # TODO(synk): at scale, scalar-prefetch input_ids and gather rows in-kernel
    # (pl.Element / manual DMA from emb at memory_space=pl.ANY) to avoid
    # materializing the padded (L*Bp, Ep) slab in HBM.
    x_emb = jnp.take(emb, input_ids, axis=0)                         # (L, B, E)
    x_flat = _pad_axis(_pad_axis(x_emb, 1, Bp), 2, Ep).reshape(L * Bp, Ep)

    if dec_hidden is None:
        h0 = jnp.zeros((1, B, H), jnp.float32)
        c0 = jnp.zeros((1, B, H), jnp.float32)
    else:
        h0, c0 = dec_hidden
    h0_p = _pad_axis(h0[0].astype(jnp.float32), 0, Bp)               # (Bp, H)
    c0_p = _pad_axis(c0[0].astype(jnp.float32), 0, Bp)

    # Pre-scale i/f/o gate columns (and bias) by 0.5 so that in-kernel
    # sigmoid(z) == 0.5*(tanh(z/2)+1) costs a single tanh over the packed
    # gates.  Scaling by 0.5 is exact in FP, so this introduces no error.
    gate_scale = jnp.concatenate([
        jnp.full((H,), 0.5, jnp.float32),    # i
        jnp.full((H,), 0.5, jnp.float32),    # f
        jnp.ones((H,), jnp.float32),         # g
        jnp.full((H,), 0.5, jnp.float32),    # o
    ])[None, :]                                                      # (1, 4H)
    wih_s = w_ih_t * gate_scale
    whh_s = w_hh_t * gate_scale
    b_s = b * gate_scale

    wih_p = _pad_axis(_pad_axis(wih_s, 0, Ep), 1, Gp)                # (Ep, Gp)
    whh_p = _pad_axis(whh_s, 1, Gp)                                  # (H, Gp)
    b_p = _pad_axis(b_s, 1, Gp)                                      # (1, Gp)
    wout_p = _pad_axis(w_out_t, 1, Vp)                               # (H, Vp)

    if use_bf16_projections:
        # v6e/v7x throughput option for the two non-recurrent matmuls only;
        # the f32 recurrence carry is unchanged.  Breaks the 1e-5 exactness
        # check, so it is off by default.
        x_flat = x_flat.astype(jnp.bfloat16)
        wih_p = wih_p.astype(jnp.bfloat16)
        wout_p = wout_p.astype(jnp.bfloat16)

    grid_spec = pltpu.PrefetchScalarGridSpec(
        num_scalar_prefetch=0,
        grid=(1,),
        in_specs=[
            pl.BlockSpec((L * Bp, Ep), lambda i: (0, 0)),      # x (all steps)
            pl.BlockSpec((Bp, H), lambda i: (0, 0)),           # h0
            pl.BlockSpec((Bp, H), lambda i: (0, 0)),           # c0
            pl.BlockSpec((Ep, Gp), lambda i: (0, 0)),          # W_ih^T (scaled)
            pl.BlockSpec((H, Gp), lambda i: (0, 0)),           # W_hh^T (scaled)
            pl.BlockSpec((1, Gp), lambda i: (0, 0)),           # bias   (scaled)
            pl.BlockSpec((H, Vp), lambda i: (0, 0)),           # W_out^T
        ],
        out_specs=[
            pl.BlockSpec((L * Bp, Vp), lambda i: (0, 0)),      # scores
            pl.BlockSpec((Bp, H), lambda i: (0, 0)),           # last hidden
            pl.BlockSpec((Bp, H), lambda i: (0, 0)),           # last cell
        ],
        scratch_shapes=[
            pltpu.VMEM((L * Bp, Gp), jnp.float32),             # gates_x slab
            pltpu.VMEM((L * Bp, H), jnp.float32),              # all hidden states
        ],
    )

    scores_p, h_last_p, c_last_p = pl.pallas_call(
        char_decoder_kernel,
        out_shape=(
            jax.ShapeDtypeStruct((L * Bp, Vp), jnp.float32),
            jax.ShapeDtypeStruct((Bp, H), jnp.float32),
            jax.ShapeDtypeStruct((Bp, H), jnp.float32),
        ),
        grid_spec=grid_spec,
        compiler_params=pltpu.CompilerParams(
            dimension_semantics=("arbitrary",)),
    )(x_flat, h0_p, c0_p, wih_p, whh_p, b_p, wout_p)

    # Padded batch rows / vocab lanes are garbage-by-design; slice them off.
    scores = scores_p.reshape(L, Bp, Vp)[:, :B, :V]
    h_last = h_last_p[:B, :][None, :, :]
    c_last = c_last_p[:B, :][None, :, :]
    return scores, (h_last, c_last)


def char_decoder_ref(input_ids, params, dec_hidden=None):
    """Pure-JAX reference (mirrors PyTorch Embedding -> LSTM -> Linear)."""
    emb, w_ih_t, w_hh_t, b, w_out_t = (params["emb"], params["w_ih_t"],
                                       params["w_hh_t"], params["b"],
                                       params["w_out_t"])
    L, B = input_ids.shape
    H = w_hh_t.shape[0]
    x_emb = jnp.take(emb, input_ids, axis=0)
    if dec_hidden is None:
        h = jnp.zeros((B, H), jnp.float32)
        c = jnp.zeros((B, H), jnp.float32)
    else:
        h, c = dec_hidden[0][0], dec_hidden[1][0]

    def step(carry, x_t):
        h, c = carry
        gates = x_t @ w_ih_t + h @ w_hh_t + b[0]
        i, f, g, o = jnp.split(gates, 4, axis=-1)
        i, f, o = jax.nn.sigmoid(i), jax.nn.sigmoid(f), jax.nn.sigmoid(o)
        g = jnp.tanh(g)
        c = f * c + i * g
        h = o * jnp.tanh(c)
        return (h, c), h @ w_out_t

    (h, c), scores = lax.scan(step, (h, c), x_emb)
    return scores, (h[None], c[None])


def make_params(key, char_vocab_size, char_embedding_size, hidden_size, pad_idx=0):
    """Deterministic synthetic parameters (shapes match the PyTorch module)."""
    k_emb, k_ih, k_hh, k_bih, k_bhh, k_out = jax.random.split(key, 6)
    scale = 1.0 / jnp.sqrt(hidden_size)
    emb = jax.random.normal(k_emb, (char_vocab_size, char_embedding_size), jnp.float32)
    emb = emb.at[pad_idx].set(0.0)  # nn.Embedding padding_idx row is zero
    # PyTorch LSTM stores weight_ih (4H, E), weight_hh (4H, H); we store transposed.
    w_ih_t = jax.random.uniform(k_ih, (char_embedding_size, 4 * hidden_size),
                                jnp.float32, -scale, scale)
    w_hh_t = jax.random.uniform(k_hh, (hidden_size, 4 * hidden_size),
                                jnp.float32, -scale, scale)
    b_ih = jax.random.uniform(k_bih, (4 * hidden_size,), jnp.float32, -scale, scale)
    b_hh = jax.random.uniform(k_bhh, (4 * hidden_size,), jnp.float32, -scale, scale)
    b = (b_ih + b_hh)[None, :]                      # (1, 4H)
    # char_output_projection: Linear(hidden, vocab, bias=False); stored transposed.
    w_out_t = jax.random.uniform(k_out, (hidden_size, char_vocab_size),
                                 jnp.float32, -scale, scale)
    return {"emb": emb, "w_ih_t": w_ih_t, "w_hh_t": w_hh_t, "b": b,
            "w_out_t": w_out_t}


if __name__ == "__main__":
    # Small shapes: length=8, batch=4, char_embedding_size=50, hidden=32, vocab=40
    L, B, E, H, V = 8, 4, 50, 32, 40
    key = jax.random.PRNGKey(0)
    k_params, k_ids, k_h, k_c = jax.random.split(key, 4)

    params = make_params(k_params, char_vocab_size=V, char_embedding_size=E,
                         hidden_size=H, pad_idx=0)
    input_ids = jax.random.randint(k_ids, (L, B), 0, V, dtype=jnp.int32)
    h0 = jax.random.normal(k_h, (1, B, H), jnp.float32)
    c0 = jax.random.normal(k_c, (1, B, H), jnp.float32)

    scores, (h_last, c_last) = char_decoder_forward(input_ids, params, (h0, c0))
    jax.block_until_ready((scores, h_last, c_last))

    # Verify against pure-JAX reference
    scores_ref, (h_ref, c_ref) = char_decoder_ref(input_ids, params, (h0, c0))
    assert scores.shape == (L, B, V)
    assert h_last.shape == (1, B, H) and c_last.shape == (1, B, H)
    assert jnp.allclose(scores, scores_ref, atol=1e-5, rtol=1e-5)
    assert jnp.allclose(h_last, h_ref, atol=1e-5, rtol=1e-5)
    assert jnp.allclose(c_last, c_ref, atol=1e-5, rtol=1e-5)

    print("KERNEL_OK")
</pallas_src>

<mosaic_0001>
module attributes {stable_mosaic.version = 11 : i64} {
  func.func @char_decoder_kernel(%arg0: i32, %arg1: memref<64x56xf32, #tpu.memory_space<vmem>>, %arg2: memref<8x32xf32, #tpu.memory_space<vmem>>, %arg3: memref<8x32xf32, #tpu.memory_space<vmem>>, %arg4: memref<56x128xf32, #tpu.memory_space<vmem>>, %arg5: memref<32x128xf32, #tpu.memory_space<vmem>>, %arg6: memref<1x128xf32, #tpu.memory_space<vmem>>, %arg7: memref<32x128xf32, #tpu.memory_space<vmem>>, %arg8: memref<64x128xf32, #tpu.memory_space<vmem>>, %arg9: memref<8x32xf32, #tpu.memory_space<vmem>>, %arg10: memref<8x32xf32, #tpu.memory_space<vmem>>, %arg11: memref<64x128xf32, #tpu.memory_space<vmem>>, %arg12: memref<64x32xf32, #tpu.memory_space<vmem>>) attributes {dimension_semantics = [#tpu.dimension_semantics<arbitrary>], iteration_bounds = array<i64: 1>, scalar_prefetch = 0 : i64, scratch_operands = 2 : i64, tpu.core_type = #tpu.core_type<tc>, window_params = [{pipeline_mode = #tpu.pipeline_mode<synchronous>, transform_indices = @transform_0, window_bounds = array<i64: 64, 56>}, {pipeline_mode = #tpu.pipeline_mode<synchronous>, transform_indices = @transform_1, window_bounds = array<i64: 8, 32>}, {pipeline_mode = #tpu.pipeline_mode<synchronous>, transform_indices = @transform_2, window_bounds = array<i64: 8, 32>}, {pipeline_mode = #tpu.pipeline_mode<synchronous>, transform_indices = @transform_3, window_bounds = array<i64: 56, 128>}, {pipeline_mode = #tpu.pipeline_mode<synchronous>, transform_indices = @transform_4, window_bounds = array<i64: 32, 128>}, {pipeline_mode = #tpu.pipeline_mode<synchronous>, transform_indices = @transform_5, window_bounds = array<i64: 1, 128>}, {pipeline_mode = #tpu.pipeline_mode<synchronous>, transform_indices = @transform_6, window_bounds = array<i64: 32, 128>}, {pipeline_mode = #tpu.pipeline_mode<synchronous>, transform_indices = @transform_7, window_bounds = array<i64: 64, 128>}, {pipeline_mode = #tpu.pipeline_mode<synchronous>, transform_indices = @transform_8, window_bounds = array<i64: 8, 32>}, {pipeline_mode = #tpu.pipeline_mode<synchronous>, transform_indices = @transform_9, window_bounds = array<i64: 8, 32>}]} {
    %c0 = arith.constant 0 : index
    %c0_0 = arith.constant 0 : index
    %0 = vector.load %arg1[%c0, %c0_0] : memref<64x56xf32, #tpu.memory_space<vmem>>, vector<64x56xf32>
    %c0_1 = arith.constant 0 : index
    %c0_2 = arith.constant 0 : index
    %1 = vector.load %arg4[%c0_1, %c0_2] : memref<56x128xf32, #tpu.memory_space<vmem>>, vector<56x128xf32>
    %cst = arith.constant dense<0.000000e+00> : vector<64x128xf32>
    %2 = tpu.matmul %0, %1, %cst {dimension_numbers = #tpu.dot_dimension_numbers<[1], [0], [0], [1], [0, 0, 1, 1], [], []>} : vector<64x56xf32>, vector<56x128xf32>, vector<64x128xf32> -> vector<64x128xf32>
    %c0_3 = arith.constant 0 : index
    %c0_4 = arith.constant 0 : index
    %3 = vector.load %arg6[%c0_3, %c0_4] : memref<1x128xf32, #tpu.memory_space<vmem>>, vector<1x128xf32>
    %4 = vector.broadcast %3 : vector<1x128xf32> to vector<64x128xf32>
    %5 = arith.addf %2, %4 : vector<64x128xf32>
    %c0_5 = arith.constant 0 : index
    %c0_6 = arith.constant 0 : index
    %6 = vector.load %arg11[%c0_5, %c0_6] : memref<64x128xf32, #tpu.memory_space<vmem>>, vector<64x128xf32>
    tpu.vector_store %arg11[%c0_5, %c0_6], %5 {strides = array<i32>} : memref<64x128xf32, #tpu.memory_space<vmem>>, vector<64x128xf32>,
    %7 = tpu.iota {dimensions = array<i32: 1>} : vector<8x128xi32>
    %c64_i32 = arith.constant 64 : i32
    %8 = vector.broadcast %c64_i32 : i32 to vector<8x128xi32>
    %9 = arith.cmpi sge, %7, %8 : vector<8x128xi32>
    %c96_i32 = arith.constant 96 : i32
    %10 = vector.broadcast %c96_i32 : i32 to vector<8x128xi32>
    %11 = arith.cmpi slt, %7, %10 : vector<8x128xi32>
    %12 = arith.andi %9, %11 : vector<8x128xi1>
    %c0_7 = arith.constant 0 : index
    %c0_8 = arith.constant 0 : index
    %13 = vector.load %arg2[%c0_7, %c0_8] : memref<8x32xf32, #tpu.memory_space<vmem>>, vector<8x32xf32>
    %c0_9 = arith.constant 0 : index
    %c0_10 = arith.constant 0 : index
    %14 = vector.load %arg3[%c0_9, %c0_10] : memref<8x32xf32, #tpu.memory_space<vmem>>, vector<8x32xf32>
    %c0_11 = arith.constant 0 : index
    %c0_12 = arith.constant 0 : index
    %15 = vector.load %arg5[%c0_11, %c0_12] : memref<32x128xf32, #tpu.memory_space<vmem>>, vector<32x128xf32>
    %c0_13 = arith.constant 0 : index
    %c0_14 = arith.constant 0 : index
    %16 = vector.load %arg11[%c0_13, %c0_14] : memref<64x128xf32, #tpu.memory_space<vmem>>, vector<8x128xf32>
    %cst_15 = arith.constant dense<0.000000e+00> : vector<8x128xf32>
    %17 = tpu.matmul %13, %15, %cst_15 {dimension_numbers = #tpu.dot_dimension_numbers<[1], [0], [0], [1], [0, 0, 1, 1], [], []>} : vector<8x32xf32>, vector<32x128xf32>, vector<8x128xf32> -> vector<8x128xf32>
    %18 = arith.addf %16, %17 : vector<8x128xf32>
    %19 = math.tanh %18 : vector<8x128xf32>
    %cst_16 = arith.constant 1.000000e+00 : f32
    %20 = vector.broadcast %cst_16 : f32 to vector<8x128xf32>
    %21 = arith.addf %19, %20 : vector<8x128xf32>
    %cst_17 = arith.constant 5.000000e-01 : f32
    %22 = vector.broadcast %cst_17 : f32 to vector<8x128xf32>
    %23 = arith.mulf %22, %21 : vector<8x128xf32>
    %24 = arith.select %12, %19, %23 : vector<8x128xi1>, vector<8x128xf32>
    %25 = vector.extract_strided_slice %24 {offsets = [0, 0], sizes = [8, 32], strides = [1, 1]} : vector<8x128xf32> to vector<8x32xf32>
    %26 = vector.extract_strided_slice %24 {offsets = [0, 32], sizes = [8, 32], strides = [1, 1]} : vector<8x128xf32> to vector<8x32xf32>
    %27 = vector.extract_strided_slice %24 {offsets = [0, 64], sizes = [8, 32], strides = [1, 1]} : vector<8x128xf32> to vector<8x32xf32>
    %28 = vector.extract_strided_slice %24 {offsets = [0, 96], sizes = [8, 32], strides = [1, 1]} : vector<8x128xf32> to vector<8x32xf32>
    %29 = arith.mulf %26, %14 : vector<8x32xf32>
    %30 = arith.mulf %25, %27 : vector<8x32xf32>
    %31 = arith.addf %29, %30 : vector<8x32xf32>
    %32 = math.tanh %31 : vector<8x32xf32>
    %33 = arith.mulf %28, %32 : vector<8x32xf32>
    %c0_18 = arith.constant 0 : index
    %c0_19 = arith.constant 0 : index
    %34 = vector.load %arg12[%c0_18, %c0_19] : memref<64x32xf32, #tpu.memory_space<vmem>>, vector<8x32xf32>
    tpu.vector_store %arg12[%c0_18, %c0_19], %33 {strides = array<i32>} : memref<64x32xf32, #tpu.memory_space<vmem>>, vector<8x32xf32>,
    %c8 = arith.constant 8 : index
    %c0_20 = arith.constant 0 : index
    %35 = vector.load %arg11[%c8, %c0_20] : memref<64x128xf32, #tpu.memory_space<vmem>>, vector<8x128xf32>
    %cst_21 = arith.constant dense<0.000000e+00> : vector<8x128xf32>
    %36 = tpu.matmul %33, %15, %cst_21 {dimension_numbers = #tpu.dot_dimension_numbers<[1], [0], [0], [1], [0, 0, 1, 1], [], []>} : vector<8x32xf32>, vector<32x128xf32>, vector<8x128xf32> -> vector<8x128xf32>
    %37 = arith.addf %35, %36 : vector<8x128xf32>
    %38 = math.tanh %37 : vector<8x128xf32>
    %cst_22 = arith.constant 1.000000e+00 : f32
    %39 = vector.broadcast %cst_22 : f32 to vector<8x128xf32>
    %40 = arith.addf %38, %39 : vector<8x128xf32>
    %cst_23 = arith.constant 5.000000e-01 : f32
    %41 = vector.broadcast %cst_23 : f32 to vector<8x128xf32>
    %42 = arith.mulf %41, %40 : vector<8x128xf32>
    %43 = arith.select %12, %38, %42 : vector<8x128xi1>, vector<8x128xf32>
    %44 = vector.extract_strided_slice %43 {offsets = [0, 0], sizes = [8, 32], strides = [1, 1]} : vector<8x128xf32> to vector<8x32xf32>
    %45 = vector.extract_strided_slice %43 {offsets = [0, 32], sizes = [8, 32], strides = [1, 1]} : vector<8x128xf32> to vector<8x32xf32>
    %46 = vector.extract_strided_slice %43 {offsets = [0, 64], sizes = [8, 32], strides = [1, 1]} : vector<8x128xf32> to vector<8x32xf32>
    %47 = vector.extract_strided_slice %43 {offsets = [0, 96], sizes = [8, 32], strides = [1, 1]} : vector<8x128xf32> to vector<8x32xf32>
    %48 = arith.mulf %45, %31 : vector<8x32xf32>
    %49 = arith.mulf %44, %46 : vector<8x32xf32>
    %50 = arith.addf %48, %49 : vector<8x32xf32>
    %51 = math.tanh %50 : vector<8x32xf32>
    %52 = arith.mulf %47, %51 : vector<8x32xf32>
    %c8_24 = arith.constant 8 : index
    %c0_25 = arith.constant 0 : index
    %53 = vector.load %arg12[%c8_24, %c0_25] : memref<64x32xf32, #tpu.memory_space<vmem>>, vector<8x32xf32>
    tpu.vector_store %arg12[%c8_24, %c0_25], %52 {strides = array<i32>} : memref<64x32xf32, #tpu.memory_space<vmem>>, vector<8x32xf32>,
    %c16 = arith.constant 16 : index
    %c0_26 = arith.constant 0 : index
    %54 = vector.load %arg11[%c16, %c0_26] : memref<64x128xf32, #tpu.memory_space<vmem>>, vector<8x128xf32>
    %cst_27 = arith.constant dense<0.000000e+00> : vector<8x128xf32>
    %55 = tpu.matmul %52, %15, %cst_27 {dimension_numbers = #tpu.dot_dimension_numbers<[1], [0], [0], [1], [0, 0, 1, 1], [], []>} : vector<8x32xf32>, vector<32x128xf32>, vector<8x128xf32> -> vector<8x128xf32>
    %56 = arith.addf %54, %55 : vector<8x128xf32>
    %57 = math.tanh %56 : vector<8x128xf32>
    %cst_28 = arith.constant 1.000000e+00 : f32
    %58 = vector.broadcast %cst_28 : f32 to vector<8x128xf32>
    %59 = arith.addf %57, %58 : vector<8x128xf32>
    %cst_29 = arith.constant 5.000000e-01 : f32
    %60 = vector.broadcast %cst_29 : f32 to vector<8x128xf32>
    %61 = arith.mulf %60, %59 : vector<8x128xf32>
    %62 = arith.select %12, %57, %61 : vector<8x128xi1>, vector<8x128xf32>
    %63 = vector.extract_strided_slice %62 {offsets = [0, 0], sizes = [8, 32], strides = [1, 1]} : vector<8x128xf32> to vector<8x32xf32>
    %64 = vector.extract_strided_slice %62 {offsets = [0, 32], sizes = [8, 32], strides = [1, 1]} : vector<8x128xf32> to vector<8x32xf32>
    %65 = vector.extract_strided_slice %62 {offsets = [0, 64], sizes = [8, 32], strides = [1, 1]} : vector<8x128xf32> to vector<8x32xf32>
    %66 = vector.extract_strided_slice %62 {offsets = [0, 96], sizes = [8, 32], strides = [1, 1]} : vector<8x128xf32> to vector<8x32xf32>
    %67 = arith.mulf %64, %50 : vector<8x32xf32>
    %68 = arith.mulf %63, %65 : vector<8x32xf32>
    %69 = arith.addf %67, %68 : vector<8x32xf32>
    %70 = math.tanh %69 : vector<8x32xf32>
    %71 = arith.mulf %66, %70 : vector<8x32xf32>
    %c16_30 = arith.constant 16 : index
    %c0_31 = arith.constant 0 : index
    %72 = vector.load %arg12[%c16_30, %c0_31] : memref<64x32xf32, #tpu.memory_space<vmem>>, vector<8x32xf32>
    tpu.vector_store %arg12[%c16_30, %c0_31], %71 {strides = array<i32>} : memref<64x32xf32, #tpu.memory_space<vmem>>, vector<8x32xf32>,
    %c24 = arith.constant 24 : index
    %c0_32 = arith.constant 0 : index
    %73 = vector.load %arg11[%c24, %c0_32] : memref<64x128xf32, #tpu.memory_space<vmem>>, vector<8x128xf32>
    %cst_33 = arith.constant dense<0.000000e+00> : vector<8x128xf32>
    %74 = tpu.matmul %71, %15, %cst_33 {dimension_numbers = #tpu.dot_dimension_numbers<[1], [0], [0], [1], [0, 0, 1, 1], [], []>} : vector<8x32xf32>, vector<32x128xf32>, vector<8x128xf32> -> vector<8x128xf32>
    %75 = arith.addf %73, %74 : vector<8x128xf32>
    %76 = math.tanh %75 : vector<8x128xf32>
    %cst_34 = arith.constant 1.000000e+00 : f32
    %77 = vector.broadcast %cst_34 : f32 to vector<8x128xf32>
    %78 = arith.addf %76, %77 : vector<8x128xf32>
    %cst_35 = arith.constant 5.000000e-01 : f32
    %79 = vector.broadcast %cst_35 : f32 to vector<8x128xf32>
    %80 = arith.mulf %79, %78 : vector<8x128xf32>
    %81 = arith.select %12, %76, %80 : vector<8x128xi1>, vector<8x128xf32>
    %82 = vector.extract_strided_slice %81 {offsets = [0, 0], sizes = [8, 32], strides = [1, 1]} : vector<8x128xf32> to vector<8x32xf32>
    %83 = vector.extract_strided_slice %81 {offsets = [0, 32], sizes = [8, 32], strides = [1, 1]} : vector<8x128xf32> to vector<8x32xf32>
    %84 = vector.extract_strided_slice %81 {offsets = [0, 64], sizes = [8, 32], strides = [1, 1]} : vector<8x128xf32> to vector<8x32xf32>
    %85 = vector.extract_strided_slice %81 {offsets = [0, 96], sizes = [8, 32], strides = [1, 1]} : vector<8x128xf32> to vector<8x32xf32>
    %86 = arith.mulf %83, %69 : vector<8x32xf32>
    %87 = arith.mulf %82, %84 : vector<8x32xf32>
    %88 = arith.addf %86, %87 : vector<8x32xf32>
    %89 = math.tanh %88 : vector<8x32xf32>
    %90 = arith.mulf %85, %89 : vector<8x32xf32>
    %c24_36 = arith.constant 24 : index
    %c0_37 = arith.constant 0 : index
    %91 = vector.load %arg12[%c24_36, %c0_37] : memref<64x32xf32, #tpu.memory_space<vmem>>, vector<8x32xf32>
    tpu.vector_store %arg12[%c24_36, %c0_37], %90 {strides = array<i32>} : memref<64x32xf32, #tpu.memory_space<vmem>>, vector<8x32xf32>,
    %c32 = arith.constant 32 : index
    %c0_38 = arith.constant 0 : index
    %92 = vector.load %arg11[%c32, %c0_38] : memref<64x128xf32, #tpu.memory_space<vmem>>, vector<8x128xf32>
    %cst_39 = arith.constant dense<0.000000e+00> : vector<8x128xf32>
    %93 = tpu.matmul %90, %15, %cst_39 {dimension_numbers = #tpu.dot_dimension_numbers<[1], [0], [0], [1], [0, 0, 1, 1], [], []>} : vector<8x32xf32>, vector<32x128xf32>, vector<8x128xf32> -> vector<8x128xf32>
    %94 = arith.addf %92, %93 : vector<8x128xf32>
    %95 = math.tanh %94 : vector<8x128xf32>
    %cst_40 = arith.constant 1.000000e+00 : f32
    %96 = vector.broadcast %cst_40 : f32 to vector<8x128xf32>
    %97 = arith.addf %95, %96 : vector<8x128xf32>
    %cst_41 = arith.constant 5.000000e-01 : f32
    %98 = vector.broadcast %cst_41 : f32 to vector<8x128xf32>
    %99 = arith.mulf %98, %97 : vector<8x128xf32>
    %100 = arith.select %12, %95, %99 : vector<8x128xi1>, vector<8x128xf32>
    %101 = vector.extract_strided_slice %100 {offsets = [0, 0], sizes = [8, 32], strides = [1, 1]} : vector<8x128xf32> to vector<8x32xf32>
    %102 = vector.extract_strided_slice %100 {offsets = [0, 32], sizes = [8, 32], strides = [1, 1]} : vector<8x128xf32> to vector<8x32xf32>
    %103 = vector.extract_strided_slice %100 {offsets = [0, 64], sizes = [8, 32], strides = [1, 1]} : vector<8x128xf32> to vector<8x32xf32>
    %104 = vector.extract_strided_slice %100 {offsets = [0, 96], sizes = [8, 32], strides = [1, 1]} : vector<8x128xf32> to vector<8x32xf32>
    %105 = arith.mulf %102, %88 : vector<8x32xf32>
    %106 = arith.mulf %101, %103 : vector<8x32xf32>
    %107 = arith.addf %105, %106 : vector<8x32xf32>
    %108 = math.tanh %107 : vector<8x32xf32>
    %109 = arith.mulf %104, %108 : vector<8x32xf32>
    %c32_42 = arith.constant 32 : index
    %c0_43 = arith.constant 0 : index
    %110 = vector.load %arg12[%c32_42, %c0_43] : memref<64x32xf32, #tpu.memory_space<vmem>>, vector<8x32xf32>
    tpu.vector_store %arg12[%c32_42, %c0_43], %109 {strides = array<i32>} : memref<64x32xf32, #tpu.memory_space<vmem>>, vector<8x32xf32>,
    %c40 = arith.constant 40 : index
    %c0_44 = arith.constant 0 : index
    %111 = vector.load %arg11[%c40, %c0_44] : memref<64x128xf32, #tpu.memory_space<vmem>>, vector<8x128xf32>
    %cst_45 = arith.constant dense<0.000000e+00> : vector<8x128xf32>
    %112 = tpu.matmul %109, %15, %cst_45 {dimension_numbers = #tpu.dot_dimension_numbers<[1], [0], [0], [1], [0, 0, 1, 1], [], []>} : vector<8x32xf32>, vector<32x128xf32>, vector<8x128xf32> -> vector<8x128xf32>
    %113 = arith.addf %111, %112 : vector<8x128xf32>
    %114 = math.tanh %113 : vector<8x128xf32>
    %cst_46 = arith.constant 1.000000e+00 : f32
    %115 = vector.broadcast %cst_46 : f32 to vector<8x128xf32>
    %116 = arith.addf %114, %115 : vector<8x128xf32>
    %cst_47 = arith.constant 5.000000e-01 : f32
    %117 = vector.broadcast %cst_47 : f32 to vector<8x128xf32>
    %118 = arith.mulf %117, %116 : vector<8x128xf32>
    %119 = arith.select %12, %114, %118 : vector<8x128xi1>, vector<8x128xf32>
    %120 = vector.extract_strided_slice %119 {offsets = [0, 0], sizes = [8, 32], strides = [1, 1]} : vector<8x128xf32> to vector<8x32xf32>
    %121 = vector.extract_strided_slice %119 {offsets = [0, 32], sizes = [8, 32], strides = [1, 1]} : vector<8x128xf32> to vector<8x32xf32>
    %122 = vector.extract_strided_slice %119 {offsets = [0, 64], sizes = [8, 32], strides = [1, 1]} : vector<8x128xf32> to vector<8x32xf32>
    %123 = vector.extract_strided_slice %119 {offsets = [0, 96], sizes = [8, 32], strides = [1, 1]} : vector<8x128xf32> to vector<8x32xf32>
    %124 = arith.mulf %121, %107 : vector<8x32xf32>
    %125 = arith.mulf %120, %122 : vector<8x32xf32>
    %126 = arith.addf %124, %125 : vector<8x32xf32>
    %127 = math.tanh %126 : vector<8x32xf32>
    %128 = arith.mulf %123, %127 : vector<8x32xf32>
    %c40_48 = arith.constant 40 : index
    %c0_49 = arith.constant 0 : index
    %129 = vector.load %arg12[%c40_48, %c0_49] : memref<64x32xf32, #tpu.memory_space<vmem>>, vector<8x32xf32>
    tpu.vector_store %arg12[%c40_48, %c0_49], %128 {strides = array<i32>} : memref<64x32xf32, #tpu.memory_space<vmem>>, vector<8x32xf32>,
    %c48 = arith.constant 48 : index
    %c0_50 = arith.constant 0 : index
    %130 = vector.load %arg11[%c48, %c0_50] : memref<64x128xf32, #tpu.memory_space<vmem>>, vector<8x128xf32>
    %cst_51 = arith.constant dense<0.000000e+00> : vector<8x128xf32>
    %131 = tpu.matmul %128, %15, %cst_51 {dimension_numbers = #tpu.dot_dimension_numbers<[1], [0], [0], [1], [0, 0, 1, 1], [], []>} : vector<8x32xf32>, vector<32x128xf32>, vector<8x128xf32> -> vector<8x128xf32>
    %132 = arith.addf %130, %131 : vector<8x128xf32>
    %133 = math.tanh %132 : vector<8x128xf32>
    %cst_52 = arith.constant 1.000000e+00 : f32
    %134 = vector.broadcast %cst_52 : f32 to vector<8x128xf32>
    %135 = arith.addf %133, %134 : vector<8x128xf32>
    %cst_53 = arith.constant 5.000000e-01 : f32
    %136 = vector.broadcast %cst_53 : f32 to vector<8x128xf32>
    %137 = arith.mulf %136, %135 : vector<8x128xf32>
    %138 = arith.select %12, %133, %137 : vector<8x128xi1>, vector<8x128xf32>
    %139 = vector.extract_strided_slice %138 {offsets = [0, 0], sizes = [8, 32], strides = [1, 1]} : vector<8x128xf32> to vector<8x32xf32>
    %140 = vector.extract_strided_slice %138 {offsets = [0, 32], sizes = [8, 32], strides = [1, 1]} : vector<8x128xf32> to vector<8x32xf32>
    %141 = vector.extract_strided_slice %138 {offsets = [0, 64], sizes = [8, 32], strides = [1, 1]} : vector<8x128xf32> to vector<8x32xf32>
    %142 = vector.extract_strided_slice %138 {offsets = [0, 96], sizes = [8, 32], strides = [1, 1]} : vector<8x128xf32> to vector<8x32xf32>
    %143 = arith.mulf %140, %126 : vector<8x32xf32>
    %144 = arith.mulf %139, %141 : vector<8x32xf32>
    %145 = arith.addf %143, %144 : vector<8x32xf32>
    %146 = math.tanh %145 : vector<8x32xf32>
    %147 = arith.mulf %142, %146 : vector<8x32xf32>
    %c48_54 = arith.constant 48 : index
    %c0_55 = arith.constant 0 : index
    %148 = vector.load %arg12[%c48_54, %c0_55] : memref<64x32xf32, #tpu.memory_space<vmem>>, vector<8x32xf32>
    tpu.vector_store %arg12[%c48_54, %c0_55], %147 {strides = array<i32>} : memref<64x32xf32, #tpu.memory_space<vmem>>, vector<8x32xf32>,
    %c56 = arith.constant 56 : index
    %c0_56 = arith.constant 0 : index
    %149 = vector.load %arg11[%c56, %c0_56] : memref<64x128xf32, #tpu.memory_space<vmem>>, vector<8x128xf32>
    %cst_57 = arith.constant dense<0.000000e+00> : vector<8x128xf32>
    %150 = tpu.matmul %147, %15, %cst_57 {dimension_numbers = #tpu.dot_dimension_numbers<[1], [0], [0], [1], [0, 0, 1, 1], [], []>} : vector<8x32xf32>, vector<32x128xf32>, vector<8x128xf32> -> vector<8x128xf32>
    %151 = arith.addf %149, %150 : vector<8x128xf32>
    %152 = math.tanh %151 : vector<8x128xf32>
    %cst_58 = arith.constant 1.000000e+00 : f32
    %153 = vector.broadcast %cst_58 : f32 to vector<8x128xf32>
    %154 = arith.addf %152, %153 : vector<8x128xf32>
    %cst_59 = arith.constant 5.000000e-01 : f32
    %155 = vector.broadcast %cst_59 : f32 to vector<8x128xf32>
    %156 = arith.mulf %155, %154 : vector<8x128xf32>
    %157 = arith.select %12, %152, %156 : vector<8x128xi1>, vector<8x128xf32>
    %158 = vector.extract_strided_slice %157 {offsets = [0, 0], sizes = [8, 32], strides = [1, 1]} : vector<8x128xf32> to vector<8x32xf32>
    %159 = vector.extract_strided_slice %157 {offsets = [0, 32], sizes = [8, 32], strides = [1, 1]} : vector<8x128xf32> to vector<8x32xf32>
    %160 = vector.extract_strided_slice %157 {offsets = [0, 64], sizes = [8, 32], strides = [1, 1]} : vector<8x128xf32> to vector<8x32xf32>
    %161 = vector.extract_strided_slice %157 {offsets = [0, 96], sizes = [8, 32], strides = [1, 1]} : vector<8x128xf32> to vector<8x32xf32>
    %162 = arith.mulf %159, %145 : vector<8x32xf32>
    %163 = arith.mulf %158, %160 : vector<8x32xf32>
    %164 = arith.addf %162, %163 : vector<8x32xf32>
    %165 = math.tanh %164 : vector<8x32xf32>
    %166 = arith.mulf %161, %165 : vector<8x32xf32>
    %c56_60 = arith.constant 56 : index
    %c0_61 = arith.constant 0 : index
    %167 = vector.load %arg12[%c56_60, %c0_61] : memref<64x32xf32, #tpu.memory_space<vmem>>, vector<8x32xf32>
    tpu.vector_store %arg12[%c56_60, %c0_61], %166 {strides = array<i32>} : memref<64x32xf32, #tpu.memory_space<vmem>>, vector<8x32xf32>,
    %c0_62 = arith.constant 0 : index
    %c0_63 = arith.constant 0 : index
    %168 = vector.load %arg9[%c0_62, %c0_63] : memref<8x32xf32, #tpu.memory_space<vmem>>, vector<8x32xf32>
    tpu.vector_store %arg9[%c0_62, %c0_63], %166 {strides = array<i32>} : memref<8x32xf32, #tpu.memory_space<vmem>>, vector<8x32xf32>,
    %c0_64 = arith.constant 0 : index
    %c0_65 = arith.constant 0 : index
    %169 = vector.load %arg10[%c0_64, %c0_65] : memref<8x32xf32, #tpu.memory_space<vmem>>, vector<8x32xf32>
    tpu.vector_store %arg10[%c0_64, %c0_65], %164 {strides = array<i32>} : memref<8x32xf32, #tpu.memory_space<vmem>>, vector<8x32xf32>,
    %c0_66 = arith.constant 0 : index
    %c0_67 = arith.constant 0 : index
    %170 = vector.load %arg12[%c0_66, %c0_67] : memref<64x32xf32, #tpu.memory_space<vmem>>, vector<64x32xf32>
    %c0_68 = arith.constant 0 : index
    %c0_69 = arith.constant 0 : index
    %171 = vector.load %arg7[%c0_68, %c0_69] : memref<32x128xf32, #tpu.memory_space<vmem>>, vector<32x128xf32>
    %cst_70 = arith.constant dense<0.000000e+00> : vector<64x128xf32>
    %172 = tpu.matmul %170, %171, %cst_70 {dimension_numbers = #tpu.dot_dimension_numbers<[1], [0], [0], [1], [0, 0, 1, 1], [], []>} : vector<64x32xf32>, vector<32x128xf32>, vector<64x128xf32> -> vector<64x128xf32>
    %c0_71 = arith.constant 0 : index
    %c0_72 = arith.constant 0 : index
    %173 = vector.load %arg8[%c0_71, %c0_72] : memref<64x128xf32, #tpu.memory_space<vmem>>, vector<64x128xf32>
    tpu.vector_store %arg8[%c0_71, %c0_72], %172 {strides = array<i32>} : memref<64x128xf32, #tpu.memory_space<vmem>>, vector<64x128xf32>,
    return
  }
  func.func @transform_0(%arg0: i32) -> (i32, i32) {
    %c0_i32 = arith.constant 0 : i32
    %c0_i32_0 = arith.constant 0 : i32
    %c0_i32_1 = arith.constant 0 : i32
    return %c0_i32, %c0_i32_0 : i32, i32
  }
  func.func @transform_1(%arg0: i32) -> (i32, i32) {
    %c0_i32 = arith.constant 0 : i32
    %c0_i32_0 = arith.constant 0 : i32
    %c0_i32_1 = arith.constant 0 : i32
    return %c0_i32, %c0_i32_0 : i32, i32
  }
  func.func @transform_2(%arg0: i32) -> (i32, i32) {
    %c0_i32 = arith.constant 0 : i32
    %c0_i32_0 = arith.constant 0 : i32
    %c0_i32_1 = arith.constant 0 : i32
    return %c0_i32, %c0_i32_0 : i32, i32
  }
  func.func @transform_3(%arg0: i32) -> (i32, i32) {
    %c0_i32 = arith.constant 0 : i32
    %c0_i32_0 = arith.constant 0 : i32
    %c0_i32_1 = arith.constant 0 : i32
    return %c0_i32, %c0_i32_0 : i32, i32
  }
  func.func @transform_4(%arg0: i32) -> (i32, i32) {
    %c0_i32 = arith.constant 0 : i32
    %c0_i32_0 = arith.constant 0 : i32
    %c0_i32_1 = arith.constant 0 : i32
    return %c0_i32, %c0_i32_0 : i32, i32
  }
  func.func @transform_5(%arg0: i32) -> (i32, i32) {
    %c0_i32 = arith.constant 0 : i32
    %c0_i32_0 = arith.constant 0 : i32
    %c0_i32_1 = arith.constant 0 : i32
    return %c0_i32, %c0_i32_0 : i32, i32
  }
  func.func @transform_6(%arg0: i32) -> (i32, i32) {
    %c0_i32 = arith.constant 0 : i32
    %c0_i32_0 = arith.constant 0 : i32
    %c0_i32_1 = arith.constant 0 : i32
    return %c0_i32, %c0_i32_0 : i32, i32
  }
  func.func @transform_7(%arg0: i32) -> (i32, i32) {
    %c0_i32 = arith.constant 0 : i32
    %c0_i32_0 = arith.constant 0 : i32
    %c0_i32_1 = arith.constant 0 : i32
    return %c0_i32, %c0_i32_0 : i32, i32
  }
  func.func @transform_8(%arg0: i32) -> (i32, i32) {
    %c0_i32 = arith.constant 0 : i32
    %c0_i32_0 = arith.constant 0 : i32
    %c0_i32_1 = arith.constant 0 : i32
    return %c0_i32, %c0_i32_0 : i32, i32
  }
  func.func @transform_9(%arg0: i32) -> (i32, i32) {
    %c0_i32 = arith.constant 0 : i32
    %c0_i32_0 = arith.constant 0 : i32
    %c0_i32_1 = arith.constant 0 : i32
    return %c0_i32, %c0_i32_0 : i32, i32
  }
}

</mosaic_0001>

<llo_original>
// kernel: tpu_custom_call.1
$region0: #{tpu_custom_call.1}
  #allocation0 [shape = 'u32[]', space=smem, size = 0x4, offset = 0x4, fixed_abs, tag = 'smem constant byte address 0x4 - core index']
  #allocation1 [shape = 'u32[144,128]{1,0:T(1,128)}', space=vmem, size = 0x12000, scoped, tag = 'internal scratch']
  #allocation2 [shape = 'f32[64,128]{1,0:T(8,128)}', space=vmem, size = 0x8000, scoped, tag = 'scratch operand']
  #allocation3 [shape = 'f32[64,32]{1,0:T(8,128)}', space=vmem, size = 0x8000, scoped, tag = 'scratch operand']
  %s0 = inlined_call_operand.vmem [shape: f32[64,56], index: 0, kind: input, shape index: {}]
  %s1 = inlined_call_operand.hbm [shape: f32[8,32], index: 1, kind: input, shape index: {}]
  %s2 = inlined_call_operand.hbm [shape: f32[8,32], index: 2, kind: input, shape index: {}]
  %s3 = inlined_call_operand.vmem [shape: f32[56,128], index: 3, kind: input, shape index: {}]
  %s4 = inlined_call_operand.vmem [shape: f32[32,128], index: 4, kind: input, shape index: {}]
  %s5 = inlined_call_operand.vmem [shape: f32[1,128], index: 5, kind: input, shape index: {}]
  %s6 = inlined_call_operand.vmem [shape: f32[32,128], index: 6, kind: input, shape index: {}]
  %s7 = inlined_call_operand.hbm [shape: f32[64,128], index: 7, kind: output, shape index: {0}]
  %s8 = inlined_call_operand.hbm [shape: f32[8,32], index: 8, kind: output, shape index: {1}]
  %s9 = inlined_call_operand.hbm [shape: f32[8,32], index: 9, kind: output, shape index: {2}]
  %10 = xla_tuple %s7, %s8, %s9
  %s11 = sld [smem:[#allocation0]]
  $region62: #{tpu_custom_call.1} parent=0
    _
  %s13 = ssub.s32 1, %s11
  %s14 = scalar_select 0, %s13, %s11
  $region1: #{tpu_custom_call.1} parent=0
    #allocation4 [shape = 'u8[4096]{0}', space=vmem, size = 0x1000, scoped, tag = 'input window, operand 1, single buffered']
    #allocation5 [shape = 's32[1]{0}', space=sflag, size = 0x4, scoped, tag = 'scoped memory for tpu_custom_call.1']
    #allocation6 [shape = 's32[1]{0}', space=sflag, size = 0x4, scoped, tag = 'scoped memory for tpu_custom_call.1']
    #allocation7 [shape = 'u8[4096]{0}', space=vmem, size = 0x1000, scoped, tag = 'input window, operand 2, single buffered']
    #allocation8 [shape = 's32[1]{0}', space=sflag, size = 0x4, scoped, tag = 'scoped memory for tpu_custom_call.1']
    #allocation9 [shape = 'u8[32768]{0}', space=vmem, size = 0x8000, scoped, tag = 'output window, operand 0, single buffered']
    #allocation10 [shape = 'u8[4096]{0}', space=vmem, size = 0x1000, scoped, tag = 'output window, operand 1, single buffered']
    #allocation11 [shape = 's32[1]{0}', space=sflag, size = 0x4, scoped, tag = 'scoped memory for tpu_custom_call.1']
    #allocation12 [shape = 'u8[4096]{0}', space=vmem, size = 0x1000, scoped, tag = 'output window, operand 2, single buffered']
    %15 = vsyncpa [#allocation5], 0
    %16 = vsyncpa [#allocation8], 0
    %17 = vsyncpa [#allocation6], 0
    %18 = vsyncpa [#allocation11], 0
    // Predicated region
    $region2: #{tpu_custom_call.1} parent=1 // pred_check
      _
    $region3: #{tpu_custom_call.1} parent=1 // pred_check_branch
      %20 = sbr.rel (0) target = $region5
    $region4: #{tpu_custom_call.1} parent=1 // pred_region
      _
    $region5: #{tpu_custom_call.1} parent=1 // pred_fallthru
      _
    // Predicated region
    $region6: #{tpu_custom_call.1} parent=1 // pred_check
      _
    $region7: #{tpu_custom_call.1} parent=1 // pred_check_branch
      %22 = sbr.rel (0) target = $region9
    $region8: #{tpu_custom_call.1} parent=1 // pred_region
      %s24 = ssub.s32 128, 128
      %25 = vsyncadd [#allocation5], %s24
      %s27 = sshll.u32 [#allocation4], 4
      %s28 = int_to_ptr.vmem [resolvable:$true] %s27
      %30 = dma.hbm_to_vmem [thread:$0]  %s1, 128, %s28, [#allocation5]
    $region9: #{tpu_custom_call.1} parent=1 // pred_fallthru
      _
    // Predicated region
    $region10: #{tpu_custom_call.1} parent=1 // pred_check
      _
    $region11: #{tpu_custom_call.1} parent=1 // pred_check_branch
      %32 = sbr.rel (0) target = $region13
    $region12: #{tpu_custom_call.1} parent=1 // pred_region
      %s34 = ssub.s32 128, 128
      %35 = vsyncadd [#allocation8], %s34
      %s37 = sshll.u32 [#allocation7], 4
      %s38 = int_to_ptr.vmem [resolvable:$true] %s37
      %40 = dma.hbm_to_vmem [thread:$0]  %s2, 128, %s38, [#allocation8]
    $region13: #{tpu_custom_call.1} parent=1 // pred_fallthru
      _
    // Predicated region
    $region14: #{tpu_custom_call.1} parent=1 // pred_check
      _
    $region15: #{tpu_custom_call.1} parent=1 // pred_check_branch
      %42 = sbr.rel (0) target = $region17
    $region16: #{tpu_custom_call.1} parent=1 // pred_region
      _
    $region17: #{tpu_custom_call.1} parent=1 // pred_fallthru
      _
    // Predicated region
    $region18: #{tpu_custom_call.1} parent=1 // pred_check
      _
    $region19: #{tpu_custom_call.1} parent=1 // pred_check_branch
      %44 = sbr.rel (0) target = $region21
    $region20: #{tpu_custom_call.1} parent=1 // pred_region
      _
    $region21: #{tpu_custom_call.1} parent=1 // pred_fallthru
      _
    // Predicated region
    $region22: #{tpu_custom_call.1} parent=1 // pred_check
      _
    $region23: #{tpu_custom_call.1} parent=1 // pred_check_branch
      %46 = sbr.rel (0) target = $region25
    $region24: #{tpu_custom_call.1} parent=1 // pred_region
      _
    $region25: #{tpu_custom_call.1} parent=1 // pred_fallthru
      _
    // Predicated region
    $region26: #{tpu_custom_call.1} parent=1 // pred_check
      _
    $region27: #{tpu_custom_call.1} parent=1 // pred_check_branch
      %48 = sbr.rel (0) target = $region29
    $region28: #{tpu_custom_call.1} parent=1 // pred_region
      _
    $region29: #{tpu_custom_call.1} parent=1 // pred_fallthru
      _
    // Predicated region
    $region30: #{tpu_custom_call.1} parent=1 // pred_check
      _
    $region31: #{tpu_custom_call.1} parent=1 // pred_check_branch
      %50 = sbr.rel (0) target = $region33
    $region32: #{tpu_custom_call.1} parent=1 // pred_region
      %51 = dma.done [#allocation5], 128
    $region33: #{tpu_custom_call.1} parent=1 // pred_fallthru
      _
    // Predicated region
    $region34: #{tpu_custom_call.1} parent=1 // pred_check
      _
    $region35: #{tpu_custom_call.1} parent=1 // pred_check_branch
      %53 = sbr.rel (0) target = $region37
    $region36: #{tpu_custom_call.1} parent=1 // pred_region
      %54 = dma.done [#allocation8], 128
    $region37: #{tpu_custom_call.1} parent=1 // pred_fallthru
      _
    %v55 = vld [vmem:[%s0] sm:$0xff]
    %v56 = vld [vmem:[%s0 + $0x8] sm:$0xff]
    %v57 = vld [vmem:[%s0 + $0x10] sm:$0xff]
    %v58 = vld [vmem:[%s0 + $0x18] sm:$0xff]
    %v59 = vld [vmem:[%s0 + $0x20] sm:$0xff]
    %v60 = vld [vmem:[%s0 + $0x28] sm:$0xff]
    %v61 = vld [vmem:[%s0 + $0x30] sm:$0xff]
    %v62 = vld [vmem:[%s0 + $0x38] sm:$0xff]
    %v63 = vld [vmem:[%s3] sm:$0xff]
    %v64 = vld [vmem:[%s3 + $0x8] sm:$0xff]
    %v65 = vld [vmem:[%s3 + $0x10] sm:$0xff]
    %v66 = vld [vmem:[%s3 + $0x18] sm:$0xff]
    %v67 = vld [vmem:[%s3 + $0x20] sm:$0xff]
    %v68 = vld [vmem:[%s3 + $0x28] sm:$0xff]
    %v69 = vld [vmem:[%s3 + $0x30] sm:$0xff]
    %v70 = vld [vmem:[%s5] sm:$0x1]
    %v72 = vlaneseq
    %v73 = vshrl.u32 %v72, 7
    %v74 = vsub.s32 0, %v73
    %v75 = vrot.slane %v70, %v74
    %vm77 = vcmask 457728
    %v79 = vsel %vm77, %v55, 0
    %v82 = vsel %vm77, %v56, 0
    %v85 = vsel %vm77, %v57, 0
    %v88 = vsel %vm77, %v58, 0
    %v91 = vsel %vm77, %v59, 0
    %v94 = vsel %vm77, %v60, 0
    %v97 = vsel %vm77, %v61, 0
    %v100 = vsel %vm77, %v62, 0
    %102 = vmatprep.subr.mxu0 0.0
    %103 = vmatpush1.msra.mxu0 %v63
    %104 = vmatprep.subr.mxu0 0.0
    %105 = vmatpush1.msra.mxu0 %v64
    %106 = vmatprep.subr.mxu0 0.0
    %107 = vmatpush1.msra.mxu0 %v65
    %108 = vmatprep.subr.mxu0 0.0
    %109 = vmatpush1.msra.mxu0 %v66
    %110 = vmatprep.subr.mxu0 0.0
    %111 = vmatpush1.msra.mxu0 %v67
    %112 = vmatprep.subr.mxu0 0.0
    %113 = vmatpush1.msra.mxu0 %v68
    %114 = vmatprep.subr.mxu0 0.0
    %115 = vmatpush1.msra.mxu0 %v69
    %116 = vmatprep.subr.mxu0 0.0
    %117 = vmatpush1.msra.mxu0 0.0
    %118 = vmatprep.subr.mxu0 0.0
    %119 = vmatpush1.msra.mxu0 0.0
    %120 = vmatprep.subr.mxu0 0.0
    %121 = vmatpush1.msra.mxu0 0.0
    %122 = vmatprep.subr.mxu0 0.0
    %123 = vmatpush1.msra.mxu0 0.0
    %124 = vmatprep.subr.mxu0 0.0
    %125 = vmatpush1.msra.mxu0 0.0
    %126 = vmatprep.subr.mxu0 0.0
    %127 = vmatpush1.msra.mxu0 0.0
    %128 = vmatprep.subr.mxu0 0.0
    %129 = vmatpush1.msra.mxu0 0.0
    %130 = vmatprep.subr.mxu0 0.0
    %131 = vmatpush1.msra.mxu0 0.0
    %132 = vmatprep.subr.mxu0 0.0
    %133 = vmatpush1.msra.mxu0 0.0
    %134 = vmatprep.subr.mxu0 0.0
    %135 = vmatpush1.msra.mxu0 0.0
    %136 = vmatprep.subr.mxu0 0.0
    %137 = vmatpush1.msra.mxu0 0.0
    %138 = vmatprep.subr.mxu0 0.0
    %139 = vmatpush1.msra.mxu0 0.0
    %140 = vmatprep.subr.mxu0 0.0
    %141 = vmatpush1.msra.mxu0 0.0
    %142 = vmatprep.subr.mxu0 0.0
    %143 = vmatpush1.msra.mxu0 0.0
    %144 = vmatprep.subr.mxu0 0.0
    %145 = vmatpush1.msra.mxu0 0.0
    %146 = vmatprep.subr.mxu0 0.0
    %147 = vmatpush1.msra.mxu0 0.0
    %148 = vmatprep.subr.mxu0 0.0
    %149 = vmatpush1.msra.mxu0 0.0
    %150 = vmatprep.subr.mxu0 0.0
    %151 = vmatpush1.msra.mxu0 0.0
    %152 = vmatprep.subr.mxu0 0.0
    %153 = vmatpush1.msra.mxu0 0.0
    %154 = vmatprep.subr.mxu0 0.0
    %155 = vmatpush1.msra.mxu0 0.0
    %156 = vmatprep.subr.mxu0 0.0
    %157 = vmatpush1.msra.mxu0 0.0
    %158 = vmatprep.subr.mxu0 0.0
    %159 = vmatpush1.msra.mxu0 0.0
    %160 = vmatprep.subr.mxu0 0.0
    %161 = vmatpush1.msra.mxu0 0.0
    %162 = vmatprep.subr.mxu0 0.0
    %163 = vmatpush1.msra.mxu0 0.0
    %164 = vmatprep.subr.mxu0 0.0
    %165 = vmatpush1.msra.mxu0 0.0
    %166 = vmatprep.mubr.f32.mxu0 0.0
    %167 = vmatmul.mubr.f32.gmra.mrb[0].mxu0 %v79
    %v168 = vpop.f32.mrb[0].mxu0
    %v169 = vadd.f32 %v75, %v168
    %v170 = vpop.f32.mrb[0].mxu0
    %171 = vmatprep.mubr.f32.mxu0 0.0
    %172 = vmatmul.mubr.f32.gmra.mrb[0].mxu0 %v82
    %v173 = vpop.f32.mrb[0].mxu0
    %v174 = vadd.f32 %v75, %v173
    %v175 = vpop.f32.mrb[0].mxu0
    %176 = vmatprep.mubr.f32.mxu0 0.0
    %177 = vmatmul.mubr.f32.gmra.mrb[0].mxu0 %v85
    %v178 = vpop.f32.mrb[0].mxu0
    %v179 = vadd.f32 %v75, %v178
    %v180 = vpop.f32.mrb[0].mxu0
    %181 = vmatprep.mubr.f32.mxu0 0.0
    %182 = vmatmul.mubr.f32.gmra.mrb[0].mxu0 %v88
    %v183 = vpop.f32.mrb[0].mxu0
    %v184 = vadd.f32 %v75, %v183
    %v185 = vpop.f32.mrb[0].mxu0
    %186 = vmatprep.mubr.f32.mxu0 0.0
    %187 = vmatmul.mubr.f32.gmra.mrb[0].mxu0 %v91
    %v188 = vpop.f32.mrb[0].mxu0
    %v189 = vadd.f32 %v75, %v188
    %v190 = vpop.f32.mrb[0].mxu0
    %191 = vmatprep.mubr.f32.mxu0 0.0
    %192 = vmatmul.mubr.f32.gmra.mrb[0].mxu0 %v94
    %v193 = vpop.f32.mrb[0].mxu0
    %v194 = vadd.f32 %v75, %v193
    %v195 = vpop.f32.mrb[0].mxu0
    %196 = vmatprep.mubr.f32.mxu0 0.0
    %197 = vmatmul.mubr.f32.gmra.mrb[0].mxu0 %v97
    %v198 = vpop.f32.mrb[0].mxu0
    %v199 = vadd.f32 %v75, %v198
    %v200 = vpop.f32.mrb[0].mxu0
    %201 = vmatprep.mubr.f32.mxu0 0.0
    %202 = vmatmul.mubr.f32.gmra.mrb[0].mxu0 %v100
    %v203 = vpop.f32.mrb[0].mxu0
    %v204 = vadd.f32 %v75, %v203
    %v205 = vpop.f32.mrb[0].mxu0
    %206 = vdwg.mxu0
    %207 = vst [vmem:[#allocation2] sm:$0xff] %v169
    %208 = vst [vmem:[#allocation2 + $0x8] sm:$0xff] %v174
    %209 = vst [vmem:[#allocation2 + $0x10] sm:$0xff] %v179
    %210 = vst [vmem:[#allocation2 + $0x18] sm:$0xff] %v184
    %211 = vst [vmem:[#allocation2 + $0x20] sm:$0xff] %v189
    %212 = vst [vmem:[#allocation2 + $0x28] sm:$0xff] %v194
    %213 = vst [vmem:[#allocation2 + $0x30] sm:$0xff] %v199
    %214 = vst [vmem:[#allocation2 + $0x38] sm:$0xff] %v204
    %v215 = vlaneseq
    %v216 = vand.u32 %v215, 127
    %vm217 = vcmp.ge.s32.totalorder %v216, 64
    %vm218 = vcmp.lt.s32.totalorder %v216, 96
    %vm219 = vmand %vm217, %vm218
    %v220 = vld [vmem:[#allocation4] sm:$0xff]
    %v221 = vld [vmem:[#allocation7] sm:$0xff]
    %v222 = vld [vmem:[%s4] sm:$0xff]
    %v223 = vld [vmem:[%s4 + $0x8] sm:$0xff]
    %v224 = vld [vmem:[%s4 + $0x10] sm:$0xff]
    %v225 = vld [vmem:[%s4 + $0x18] sm:$0xff]
    %v226 = vld [vmem:[#allocation2] sm:$0xff]
    %vm227 = vcmask 261120
    %v229 = vsel %vm227, %v220, 0
    %231 = vmatprep.subr.mxu0 0.0
    %232 = vmatpush1.msra.mxu0 %v222
    %233 = vmatprep.subr.mxu0 0.0
    %234 = vmatpush1.msra.mxu0 %v223
    %235 = vmatprep.subr.mxu0 0.0
    %236 = vmatpush1.msra.mxu0 %v224
    %237 = vmatprep.subr.mxu0 0.0
    %238 = vmatpush1.msra.mxu0 %v225
    %239 = vmatprep.subr.mxu0 0.0
    %240 = vmatpush1.msra.mxu0 0.0
    %241 = vmatprep.subr.mxu0 0.0
    %242 = vmatpush1.msra.mxu0 0.0
    %243 = vmatprep.subr.mxu0 0.0
    %244 = vmatpush1.msra.mxu0 0.0
    %245 = vmatprep.subr.mxu0 0.0
    %246 = vmatpush1.msra.mxu0 0.0
    %247 = vmatprep.subr.mxu0 0.0
    %248 = vmatpush1.msra.mxu0 0.0
    %249 = vmatprep.subr.mxu0 0.0
    %250 = vmatpush1.msra.mxu0 0.0
    %251 = vmatprep.subr.mxu0 0.0
    %252 = vmatpush1.msra.mxu0 0.0
    %253 = vmatprep.subr.mxu0 0.0
    %254 = vmatpush1.msra.mxu0 0.0
    %255 = vmatprep.subr.mxu0 0.0
    %256 = vmatpush1.msra.mxu0 0.0
    %257 = vmatprep.subr.mxu0 0.0
    %258 = vmatpush1.msra.mxu0 0.0
    %259 = vmatprep.subr.mxu0 0.0
    %260 = vmatpush1.msra.mxu0 0.0
    %261 = vmatprep.subr.mxu0 0.0
    %262 = vmatpush1.msra.mxu0 0.0
    %263 = vmatprep.subr.mxu0 0.0
    %264 = vmatpush1.msra.mxu0 0.0
    %265 = vmatprep.subr.mxu0 0.0
    %266 = vmatpush1.msra.mxu0 0.0
    %267 = vmatprep.subr.mxu0 0.0
    %268 = vmatpush1.msra.mxu0 0.0
    %269 = vmatprep.subr.mxu0 0.0
    %270 = vmatpush1.msra.mxu0 0.0
    %271 = vmatprep.subr.mxu0 0.0
    %272 = vmatpush1.msra.mxu0 0.0
    %273 = vmatprep.subr.mxu0 0.0
    %274 = vmatpush1.msra.mxu0 0.0
    %275 = vmatprep.subr.mxu0 0.0
    %276 = vmatpush1.msra.mxu0 0.0
    %277 = vmatprep.subr.mxu0 0.0
    %278 = vmatpush1.msra.mxu0 0.0
    %279 = vmatprep.subr.mxu0 0.0
    %280 = vmatpush1.msra.mxu0 0.0
    %281 = vmatprep.subr.mxu0 0.0
    %282 = vmatpush1.msra.mxu0 0.0
    %283 = vmatprep.subr.mxu0 0.0
    %284 = vmatpush1.msra.mxu0 0.0
    %285 = vmatprep.subr.mxu0 0.0
    %286 = vmatpush1.msra.mxu0 0.0
    %287 = vmatprep.subr.mxu0 0.0
    %288 = vmatpush1.msra.mxu0 0.0
    %289 = vmatprep.subr.mxu0 0.0
    %290 = vmatpush1.msra.mxu0 0.0
    %291 = vmatprep.subr.mxu0 0.0
    %292 = vmatpush1.msra.mxu0 0.0
    %293 = vmatprep.subr.mxu0 0.0
    %294 = vmatpush1.msra.mxu0 0.0
    %295 = vmatprep.mubr.f32.mxu0 0.0
    %296 = vmatmul.mubr.f32.gmra.mrb[0].mxu0 %v229
    %v297 = vpop.f32.mrb[0].mxu0
    %v298 = vadd.f32 0.0, %v297
    %v299 = vpop.f32.mrb[0].mxu0
    %300 = vdwg.mxu0
    %v301 = vadd.f32 %v226, %v298
    %v302 = vtanh.pop %v301
    %v303 = vadd.f32 %v302, 1.0
    %v304 = vmul.f32 %v303, 0.5
    %v305 = vsel %vm219, %v302, %v304
    %307 = vrot.lane.b32.xlu0 %v221, 32
    %v308 = vpop.permute.xlu0 %307
    %v310 = vmul.f32 %v305, %v308
    %312 = vrot.lane.b32.xlu0 %v305, 64
    %v313 = vpop.permute.xlu0 %312
    %v315 = vmul.f32 %v305, %v313
    %317 = vrot.lane.b32.xlu0 %v315, 32
    %v318 = vpop.permute.xlu0 %317
    %v320 = vadd.f32 %v310, %v318
    %v321 = vtanh.pop %v320
    %323 = vrot.lane.b32.xlu0 %v321, 64
    %v324 = vpop.permute.xlu0 %323
    %v326 = vmul.f32 %v305, %v324
    %328 = vrot.lane.b32.xlu0 %v326, 32
    %v329 = vpop.permute.xlu0 %328
    %331 = vst.msk [vmem:[#allocation3] sm:$0xff] %vm227, %v329
    %v332 = vld [vmem:[#allocation2 + $0x8] sm:$0xff]
    %v333 = vsel %vm227, %v329, 0
    %335 = vmatprep.subr.mxu0 0.0
    %336 = vmatpush1.msra.mxu0 %v222
    %337 = vmatprep.subr.mxu0 0.0
    %338 = vmatpush1.msra.mxu0 %v223
    %339 = vmatprep.subr.mxu0 0.0
    %340 = vmatpush1.msra.mxu0 %v224
    %341 = vmatprep.subr.mxu0 0.0
    %342 = vmatpush1.msra.mxu0 %v225
    %343 = vmatprep.subr.mxu0 0.0
    %344 = vmatpush1.msra.mxu0 0.0
    %345 = vmatprep.subr.mxu0 0.0
    %346 = vmatpush1.msra.mxu0 0.0
    %347 = vmatprep.subr.mxu0 0.0
    %348 = vmatpush1.msra.mxu0 0.0
    %349 = vmatprep.subr.mxu0 0.0
    %350 = vmatpush1.msra.mxu0 0.0
    %351 = vmatprep.subr.mxu0 0.0
    %352 = vmatpush1.msra.mxu0 0.0
    %353 = vmatprep.subr.mxu0 0.0
    %354 = vmatpush1.msra.mxu0 0.0
    %355 = vmatprep.subr.mxu0 0.0
    %356 = vmatpush1.msra.mxu0 0.0
    %357 = vmatprep.subr.mxu0 0.0
    %358 = vmatpush1.msra.mxu0 0.0
    %359 = vmatprep.subr.mxu0 0.0
    %360 = vmatpush1.msra.mxu0 0.0
    %361 = vmatprep.subr.mxu0 0.0
    %362 = vmatpush1.msra.mxu0 0.0
    %363 = vmatprep.subr.mxu0 0.0
    %364 = vmatpush1.msra.mxu0 0.0
    %365 = vmatprep.subr.mxu0 0.0
    %366 = vmatpush1.msra.mxu0 0.0
    %367 = vmatprep.subr.mxu0 0.0
    %368 = vmatpush1.msra.mxu0 0.0
    %369 = vmatprep.subr.mxu0 0.0
    %370 = vmatpush1.msra.mxu0 0.0
    %371 = vmatprep.subr.mxu0 0.0
    %372 = vmatpush1.msra.mxu0 0.0
    %373 = vmatprep.subr.mxu0 0.0
    %374 = vmatpush1.msra.mxu0 0.0
    %375 = vmatprep.subr.mxu0 0.0
    %376 = vmatpush1.msra.mxu0 0.0
    %377 = vmatprep.subr.mxu0 0.0
    %378 = vmatpush1.msra.mxu0 0.0
    %379 = vmatprep.subr.mxu0 0.0
    %380 = vmatpush1.msra.mxu0 0.0
    %381 = vmatprep.subr.mxu0 0.0
    %382 = vmatpush1.msra.mxu0 0.0
    %383 = vmatprep.subr.mxu0 0.0
    %384 = vmatpush1.msra.mxu0 0.0
    %385 = vmatprep.subr.mxu0 0.0
    %386 = vmatpush1.msra.mxu0 0.0
    %387 = vmatprep.subr.mxu0 0.0
    %388 = vmatpush1.msra.mxu0 0.0
    %389 = vmatprep.subr.mxu0 0.0
    %390 = vmatpush1.msra.mxu0 0.0
    %391 = vmatprep.subr.mxu0 0.0
    %392 = vmatpush1.msra.mxu0 0.0
    %393 = vmatprep.subr.mxu0 0.0
    %394 = vmatpush1.msra.mxu0 0.0
    %395 = vmatprep.subr.mxu0 0.0
    %396 = vmatpush1.msra.mxu0 0.0
    %397 = vmatprep.subr.mxu0 0.0
    %398 = vmatpush1.msra.mxu0 0.0
    %399 = vmatprep.mubr.f32.mxu0 0.0
    %400 = vmatmul.mubr.f32.gmra.mrb[0].mxu0 %v333
    %v401 = vpop.f32.mrb[0].mxu0
    %v402 = vadd.f32 0.0, %v401
    %v403 = vpop.f32.mrb[0].mxu0
    %404 = vdwg.mxu0
    %v405 = vadd.f32 %v332, %v402
    %v406 = vtanh.pop %v405
    %v407 = vadd.f32 %v406, 1.0
    %v408 = vmul.f32 %v407, 0.5
    %v409 = vsel %vm219, %v406, %v408
    %v410 = vmul.f32 %v409, %v320
    %412 = vrot.lane.b32.xlu0 %v409, 64
    %v413 = vpop.permute.xlu0 %412
    %v415 = vmul.f32 %v409, %v413
    %417 = vrot.lane.b32.xlu0 %v415, 32
    %v418 = vpop.permute.xlu0 %417
    %v420 = vadd.f32 %v410, %v418
    %v421 = vtanh.pop %v420
    %423 = vrot.lane.b32.xlu0 %v421, 64
    %v424 = vpop.permute.xlu0 %423
    %v426 = vmul.f32 %v409, %v424
    %428 = vrot.lane.b32.xlu0 %v426, 32
    %v429 = vpop.permute.xlu0 %428
    %431 = vst.msk [vmem:[#allocation3 + $0x8] sm:$0xff] %vm227, %v429
    %v432 = vld [vmem:[#allocation2 + $0x10] sm:$0xff]
    %v433 = vsel %vm227, %v429, 0
    %435 = vmatprep.subr.mxu0 0.0
    %436 = vmatpush1.msra.mxu0 %v222
    %437 = vmatprep.subr.mxu0 0.0
    %438 = vmatpush1.msra.mxu0 %v223
    %439 = vmatprep.subr.mxu0 0.0
    %440 = vmatpush1.msra.mxu0 %v224
    %441 = vmatprep.subr.mxu0 0.0
    %442 = vmatpush1.msra.mxu0 %v225
    %443 = vmatprep.subr.mxu0 0.0
    %444 = vmatpush1.msra.mxu0 0.0
    %445 = vmatprep.subr.mxu0 0.0
    %446 = vmatpush1.msra.mxu0 0.0
    %447 = vmatprep.subr.mxu0 0.0
    %448 = vmatpush1.msra.mxu0 0.0
    %449 = vmatprep.subr.mxu0 0.0
    %450 = vmatpush1.msra.mxu0 0.0
    %451 = vmatprep.subr.mxu0 0.0
    %452 = vmatpush1.msra.mxu0 0.0
    %453 = vmatprep.subr.mxu0 0.0
    %454 = vmatpush1.msra.mxu0 0.0
    %455 = vmatprep.subr.mxu0 0.0
    %456 = vmatpush1.msra.mxu0 0.0
    %457 = vmatprep.subr.mxu0 0.0
    %458 = vmatpush1.msra.mxu0 0.0
    %459 = vmatprep.subr.mxu0 0.0
    %460 = vmatpush1.msra.mxu0 0.0
    %461 = vmatprep.subr.mxu0 0.0
    %462 = vmatpush1.msra.mxu0 0.0
    %463 = vmatprep.subr.mxu0 0.0
    %464 = vmatpush1.msra.mxu0 0.0
    %465 = vmatprep.subr.mxu0 0.0
    %466 = vmatpush1.msra.mxu0 0.0
    %467 = vmatprep.subr.mxu0 0.0
    %468 = vmatpush1.msra.mxu0 0.0
    %469 = vmatprep.subr.mxu0 0.0
    %470 = vmatpush1.msra.mxu0 0.0
    %471 = vmatprep.subr.mxu0 0.0
    %472 = vmatpush1.msra.mxu0 0.0
    %473 = vmatprep.subr.mxu0 0.0
    %474 = vmatpush1.msra.mxu0 0.0
    %475 = vmatprep.subr.mxu0 0.0
    %476 = vmatpush1.msra.mxu0 0.0
    %477 = vmatprep.subr.mxu0 0.0
    %478 = vmatpush1.msra.mxu0 0.0
    %479 = vmatprep.subr.mxu0 0.0
    %480 = vmatpush1.msra.mxu0 0.0
    %481 = vmatprep.subr.mxu0 0.0
    %482 = vmatpush1.msra.mxu0 0.0
    %483 = vmatprep.subr.mxu0 0.0
    %484 = vmatpush1.msra.mxu0 0.0
    %485 = vmatprep.subr.mxu0 0.0
    %486 = vmatpush1.msra.mxu0 0.0
    %487 = vmatprep.subr.mxu0 0.0
    %488 = vmatpush1.msra.mxu0 0.0
    %489 = vmatprep.subr.mxu0 0.0
    %490 = vmatpush1.msra.mxu0 0.0
    %491 = vmatprep.subr.mxu0 0.0
    %492 = vmatpush1.msra.mxu0 0.0
    %493 = vmatprep.subr.mxu0 0.0
    %494 = vmatpush1.msra.mxu0 0.0
    %495 = vmatprep.subr.mxu0 0.0
    %496 = vmatpush1.msra.mxu0 0.0
    %497 = vmatprep.subr.mxu0 0.0
    %498 = vmatpush1.msra.mxu0 0.0
    %499 = vmatprep.mubr.f32.mxu0 0.0
    %500 = vmatmul.mubr.f32.gmra.mrb[0].mxu0 %v433
    %v501 = vpop.f32.mrb[0].mxu0
    %v502 = vadd.f32 0.0, %v501
    %v503 = vpop.f32.mrb[0].mxu0
    %504 = vdwg.mxu0
    %v505 = vadd.f32 %v432, %v502
    %v506 = vtanh.pop %v505
    %v507 = vadd.f32 %v506, 1.0
    %v508 = vmul.f32 %v507, 0.5
    %v509 = vsel %vm219, %v506, %v508
    %v510 = vmul.f32 %v509, %v420
    %512 = vrot.lane.b32.xlu0 %v509, 64
    %v513 = vpop.permute.xlu0 %512
    %v515 = vmul.f32 %v509, %v513
    %517 = vrot.lane.b32.xlu0 %v515, 32
    %v518 = vpop.permute.xlu0 %517
    %v520 = vadd.f32 %v510, %v518
    %v521 = vtanh.pop %v520
    %523 = vrot.lane.b32.xlu0 %v521, 64
    %v524 = vpop.permute.xlu0 %523
    %v526 = vmul.f32 %v509, %v524
    %528 = vrot.lane.b32.xlu0 %v526, 32
    %v529 = vpop.permute.xlu0 %528
    %531 = vst.msk [vmem:[#allocation3 + $0x10] sm:$0xff] %vm227, %v529
    %v532 = vld [vmem:[#allocation2 + $0x18] sm:$0xff]
    %v533 = vsel %vm227, %v529, 0
    %535 = vmatprep.subr.mxu0 0.0
    %536 = vmatpush1.msra.mxu0 %v222
    %537 = vmatprep.subr.mxu0 0.0
    %538 = vmatpush1.msra.mxu0 %v223
    %539 = vmatprep.subr.mxu0 0.0
    %540 = vmatpush1.msra.mxu0 %v224
    %541 = vmatprep.subr.mxu0 0.0
    %542 = vmatpush1.msra.mxu0 %v225
    %543 = vmatprep.subr.mxu0 0.0
    %544 = vmatpush1.msra.mxu0 0.0
    %545 = vmatprep.subr.mxu0 0.0
    %546 = vmatpush1.msra.mxu0 0.0
    %547 = vmatprep.subr.mxu0 0.0
    %548 = vmatpush1.msra.mxu0 0.0
    %549 = vmatprep.subr.mxu0 0.0
    %550 = vmatpush1.msra.mxu0 0.0
    %551 = vmatprep.subr.mxu0 0.0
    %552 = vmatpush1.msra.mxu0 0.0
    %553 = vmatprep.subr.mxu0 0.0
    %554 = vmatpush1.msra.mxu0 0.0
    %555 = vmatprep.subr.mxu0 0.0
    %556 = vmatpush1.msra.mxu0 0.0
    %557 = vmatprep.subr.mxu0 0.0
    %558 = vmatpush1.msra.mxu0 0.0
    %559 = vmatprep.subr.mxu0 0.0
    %560 = vmatpush1.msra.mxu0 0.0
    %561 = vmatprep.subr.mxu0 0.0
    %562 = vmatpush1.msra.mxu0 0.0
    %563 = vmatprep.subr.mxu0 0.0
    %564 = vmatpush1.msra.mxu0 0.0
    %565 = vmatprep.subr.mxu0 0.0
    %566 = vmatpush1.msra.mxu0 0.0
    %567 = vmatprep.subr.mxu0 0.0
    %568 = vmatpush1.msra.mxu0 0.0
    %569 = vmatprep.subr.mxu0 0.0
    %570 = vmatpush1.msra.mxu0 0.0
    %571 = vmatprep.subr.mxu0 0.0
    %572 = vmatpush1.msra.mxu0 0.0
    %573 = vmatprep.subr.mxu0 0.0
    %574 = vmatpush1.msra.mxu0 0.0
    %575 = vmatprep.subr.mxu0 0.0
    %576 = vmatpush1.msra.mxu0 0.0
    %577 = vmatprep.subr.mxu0 0.0
    %578 = vmatpush1.msra.mxu0 0.0
    %579 = vmatprep.subr.mxu0 0.0
    %580 = vmatpush1.msra.mxu0 0.0
    %581 = vmatprep.subr.mxu0 0.0
    %582 = vmatpush1.msra.mxu0 0.0
    %583 = vmatprep.subr.mxu0 0.0
    %584 = vmatpush1.msra.mxu0 0.0
    %585 = vmatprep.subr.mxu0 0.0
    %586 = vmatpush1.msra.mxu0 0.0
    %587 = vmatprep.subr.mxu0 0.0
    %588 = vmatpush1.msra.mxu0 0.0
    %589 = vmatprep.subr.mxu0 0.0
    %590 = vmatpush1.msra.mxu0 0.0
    %591 = vmatprep.subr.mxu0 0.0
    %592 = vmatpush1.msra.mxu0 0.0
    %593 = vmatprep.subr.mxu0 0.0
    %594 = vmatpush1.msra.mxu0 0.0
    %595 = vmatprep.subr.mxu0 0.0
    %596 = vmatpush1.msra.mxu0 0.0
    %597 = vmatprep.subr.mxu0 0.0
    %598 = vmatpush1.msra.mxu0 0.0
    %599 = vmatprep.mubr.f32.mxu0 0.0
    %600 = vmatmul.mubr.f32.gmra.mrb[0].mxu0 %v533
    %v601 = vpop.f32.mrb[0].mxu0
    %v602 = vadd.f32 0.0, %v601
    %v603 = vpop.f32.mrb[0].mxu0
    %604 = vdwg.mxu0
    %v605 = vadd.f32 %v532, %v602
    %v606 = vtanh.pop %v605
    %v607 = vadd.f32 %v606, 1.0
    %v608 = vmul.f32 %v607, 0.5
    %v609 = vsel %vm219, %v606, %v608
    %v610 = vmul.f32 %v609, %v520
    %612 = vrot.lane.b32.xlu0 %v609, 64
    %v613 = vpop.permute.xlu0 %612
    %v615 = vmul.f32 %v609, %v613
    %617 = vrot.lane.b32.xlu0 %v615, 32
    %v618 = vpop.permute.xlu0 %617
    %v620 = vadd.f32 %v610, %v618
    %v621 = vtanh.pop %v620
    %623 = vrot.lane.b32.xlu0 %v621, 64
    %v624 = vpop.permute.xlu0 %623
    %v626 = vmul.f32 %v609, %v624
    %628 = vrot.lane.b32.xlu0 %v626, 32
    %v629 = vpop.permute.xlu0 %628
    %631 = vst.msk [vmem:[#allocation3 + $0x18] sm:$0xff] %vm227, %v629
    %v632 = vld [vmem:[#allocation2 + $0x20] sm:$0xff]
    %v633 = vsel %vm227, %v629, 0
    %635 = vmatprep.subr.mxu0 0.0
    %636 = vmatpush1.msra.mxu0 %v222
    %637 = vmatprep.subr.mxu0 0.0
    %638 = vmatpush1.msra.mxu0 %v223
    %639 = vmatprep.subr.mxu0 0.0
    %640 = vmatpush1.msra.mxu0 %v224
    %641 = vmatprep.subr.mxu0 0.0
    %642 = vmatpush1.msra.mxu0 %v225
    %643 = vmatprep.subr.mxu0 0.0
    %644 = vmatpush1.msra.mxu0 0.0
    %645 = vmatprep.subr.mxu0 0.0
    %646 = vmatpush1.msra.mxu0 0.0
    %647 = vmatprep.subr.mxu0 0.0
    %648 = vmatpush1.msra.mxu0 0.0
    %649 = vmatprep.subr.mxu0 0.0
    %650 = vmatpush1.msra.mxu0 0.0
    %651 = vmatprep.subr.mxu0 0.0
    %652 = vmatpush1.msra.mxu0 0.0
    %653 = vmatprep.subr.mxu0 0.0
    %654 = vmatpush1.msra.mxu0 0.0
    %655 = vmatprep.subr.mxu0 0.0
    %656 = vmatpush1.msra.mxu0 0.0
    %657 = vmatprep.subr.mxu0 0.0
    %658 = vmatpush1.msra.mxu0 0.0
    %659 = vmatprep.subr.mxu0 0.0
    %660 = vmatpush1.msra.mxu0 0.0
    %661 = vmatprep.subr.mxu0 0.0
    %662 = vmatpush1.msra.mxu0 0.0
    %663 = vmatprep.subr.mxu0 0.0
    %664 = vmatpush1.msra.mxu0 0.0
    %665 = vmatprep.subr.mxu0 0.0
    %666 = vmatpush1.msra.mxu0 0.0
    %667 = vmatprep.subr.mxu0 0.0
    %668 = vmatpush1.msra.mxu0 0.0
    %669 = vmatprep.subr.mxu0 0.0
    %670 = vmatpush1.msra.mxu0 0.0
    %671 = vmatprep.subr.mxu0 0.0
    %672 = vmatpush1.msra.mxu0 0.0
    %673 = vmatprep.subr.mxu0 0.0
    %674 = vmatpush1.msra.mxu0 0.0
    %675 = vmatprep.subr.mxu0 0.0
    %676 = vmatpush1.msra.mxu0 0.0
    %677 = vmatprep.subr.mxu0 0.0
    %678 = vmatpush1.msra.mxu0 0.0
    %679 = vmatprep.subr.mxu0 0.0
    %680 = vmatpush1.msra.mxu0 0.0
    %681 = vmatprep.subr.mxu0 0.0
    %682 = vmatpush1.msra.mxu0 0.0
    %683 = vmatprep.subr.mxu0 0.0
    %684 = vmatpush1.msra.mxu0 0.0
    %685 = vmatprep.subr.mxu0 0.0
    %686 = vmatpush1.msra.mxu0 0.0
    %687 = vmatprep.subr.mxu0 0.0
    %688 = vmatpush1.msra.mxu0 0.0
    %689 = vmatprep.subr.mxu0 0.0
    %690 = vmatpush1.msra.mxu0 0.0
    %691 = vmatprep.subr.mxu0 0.0
    %692 = vmatpush1.msra.mxu0 0.0
    %693 = vmatprep.subr.mxu0 0.0
    %694 = vmatpush1.msra.mxu0 0.0
    %695 = vmatprep.subr.mxu0 0.0
    %696 = vmatpush1.msra.mxu0 0.0
    %697 = vmatprep.subr.mxu0 0.0
    %698 = vmatpush1.msra.mxu0 0.0
    %699 = vmatprep.mubr.f32.mxu0 0.0
    %700 = vmatmul.mubr.f32.gmra.mrb[0].mxu0 %v633
    %v701 = vpop.f32.mrb[0].mxu0
    %v702 = vadd.f32 0.0, %v701
    %v703 = vpop.f32.mrb[0].mxu0
    %704 = vdwg.mxu0
    %v705 = vadd.f32 %v632, %v702
    %v706 = vtanh.pop %v705
    %v707 = vadd.f32 %v706, 1.0
    %v708 = vmul.f32 %v707, 0.5
    %v709 = vsel %vm219, %v706, %v708
    %v710 = vmul.f32 %v709, %v620
    %712 = vrot.lane.b32.xlu0 %v709, 64
    %v713 = vpop.permute.xlu0 %712
    %v715 = vmul.f32 %v709, %v713
    %717 = vrot.lane.b32.xlu0 %v715, 32
    %v718 = vpop.permute.xlu0 %717
    %v720 = vadd.f32 %v710, %v718
    %v721 = vtanh.pop %v720
    %723 = vrot.lane.b32.xlu0 %v721, 64
    %v724 = vpop.permute.xlu0 %723
    %v726 = vmul.f32 %v709, %v724
    %728 = vrot.lane.b32.xlu0 %v726, 32
    %v729 = vpop.permute.xlu0 %728
    %731 = vst.msk [vmem:[#allocation3 + $0x20] sm:$0xff] %vm227, %v729
    %v732 = vld [vmem:[#allocation2 + $0x28] sm:$0xff]
    %v733 = vsel %vm227, %v729, 0
    %735 = vmatprep.subr.mxu0 0.0
    %736 = vmatpush1.msra.mxu0 %v222
    %737 = vmatprep.subr.mxu0 0.0
    %738 = vmatpush1.msra.mxu0 %v223
    %739 = vmatprep.subr.mxu0 0.0
    %740 = vmatpush1.msra.mxu0 %v224
    %741 = vmatprep.subr.mxu0 0.0
    %742 = vmatpush1.msra.mxu0 %v225
    %743 = vmatprep.subr.mxu0 0.0
    %744 = vmatpush1.msra.mxu0 0.0
    %745 = vmatprep.subr.mxu0 0.0
    %746 = vmatpush1.msra.mxu0 0.0
    %747 = vmatprep.subr.mxu0 0.0
    %748 = vmatpush1.msra.mxu0 0.0
    %749 = vmatprep.subr.mxu0 0.0
    %750 = vmatpush1.msra.mxu0 0.0
    %751 = vmatprep.subr.mxu0 0.0
    %752 = vmatpush1.msra.mxu0 0.0
    %753 = vmatprep.subr.mxu0 0.0
    %754 = vmatpush1.msra.mxu0 0.0
    %755 = vmatprep.subr.mxu0 0.0
    %756 = vmatpush1.msra.mxu0 0.0
    %757 = vmatprep.subr.mxu0 0.0
    %758 = vmatpush1.msra.mxu0 0.0
    %759 = vmatprep.subr.mxu0 0.0
    %760 = vmatpush1.msra.mxu0 0.0
    %761 = vmatprep.subr.mxu0 0.0
    %762 = vmatpush1.msra.mxu0 0.0
    %763 = vmatprep.subr.mxu0 0.0
    %764 = vmatpush1.msra.mxu0 0.0
    %765 = vmatprep.subr.mxu0 0.0
    %766 = vmatpush1.msra.mxu0 0.0
    %767 = vmatprep.subr.mxu0 0.0
    %768 = vmatpush1.msra.mxu0 0.0
    %769 = vmatprep.subr.mxu0 0.0
    %770 = vmatpush1.msra.mxu0 0.0
    %771 = vmatprep.subr.mxu0 0.0
    %772 = vmatpush1.msra.mxu0 0.0
    %773 = vmatprep.subr.mxu0 0.0
    %774 = vmatpush1.msra.mxu0 0.0
    %775 = vmatprep.subr.mxu0 0.0
    %776 = vmatpush1.msra.mxu0 0.0
    %777 = vmatprep.subr.mxu0 0.0
    %778 = vmatpush1.msra.mxu0 0.0
    %779 = vmatprep.subr.mxu0 0.0
    %780 = vmatpush1.msra.mxu0 0.0
    %781 = vmatprep.subr.mxu0 0.0
    %782 = vmatpush1.msra.mxu0 0.0
    %783 = vmatprep.subr.mxu0 0.0
    %784 = vmatpush1.msra.mxu0 0.0
    %785 = vmatprep.subr.mxu0 0.0
    %786 = vmatpush1.msra.mxu0 0.0
    %787 = vmatprep.subr.mxu0 0.0
    %788 = vmatpush1.msra.mxu0 0.0
    %789 = vmatprep.subr.mxu0 0.0
    %790 = vmatpush1.msra.mxu0 0.0
    %791 = vmatprep.subr.mxu0 0.0
    %792 = vmatpush1.msra.mxu0 0.0
    %793 = vmatprep.subr.mxu0 0.0
    %794 = vmatpush1.msra.mxu0 0.0
    %795 = vmatprep.subr.mxu0 0.0
    %796 = vmatpush1.msra.mxu0 0.0
    %797 = vmatprep.subr.mxu0 0.0
    %798 = vmatpush1.msra.mxu0 0.0
    %799 = vmatprep.mubr.f32.mxu0 0.0
    %800 = vmatmul.mubr.f32.gmra.mrb[0].mxu0 %v733
    %v801 = vpop.f32.mrb[0].mxu0
    %v802 = vadd.f32 0.0, %v801
    %v803 = vpop.f32.mrb[0].mxu0
    %804 = vdwg.mxu0
    %v805 = vadd.f32 %v732, %v802
    %v806 = vtanh.pop %v805
    %v807 = vadd.f32 %v806, 1.0
    %v808 = vmul.f32 %v807, 0.5
    %v809 = vsel %vm219, %v806, %v808
    %v810 = vmul.f32 %v809, %v720
    %812 = vrot.lane.b32.xlu0 %v809, 64
    %v813 = vpop.permute.xlu0 %812
    %v815 = vmul.f32 %v809, %v813
    %817 = vrot.lane.b32.xlu0 %v815, 32
    %v818 = vpop.permute.xlu0 %817
    %v820 = vadd.f32 %v810, %v818
    %v821 = vtanh.pop %v820
    %823 = vrot.lane.b32.xlu0 %v821, 64
    %v824 = vpop.permute.xlu0 %823
    %v826 = vmul.f32 %v809, %v824
    %828 = vrot.lane.b32.xlu0 %v826, 32
    %v829 = vpop.permute.xlu0 %828
    %831 = vst.msk [vmem:[#allocation3 + $0x28] sm:$0xff] %vm227, %v829
    %v832 = vld [vmem:[#allocation2 + $0x30] sm:$0xff]
    %v833 = vsel %vm227, %v829, 0
    %835 = vmatprep.subr.mxu0 0.0
    %836 = vmatpush1.msra.mxu0 %v222
    %837 = vmatprep.subr.mxu0 0.0
    %838 = vmatpush1.msra.mxu0 %v223
    %839 = vmatprep.subr.mxu0 0.0
    %840 = vmatpush1.msra.mxu0 %v224
    %841 = vmatprep.subr.mxu0 0.0
    %842 = vmatpush1.msra.mxu0 %v225
    %843 = vmatprep.subr.mxu0 0.0
    %844 = vmatpush1.msra.mxu0 0.0
    %845 = vmatprep.subr.mxu0 0.0
    %846 = vmatpush1.msra.mxu0 0.0
    %847 = vmatprep.subr.mxu0 0.0
    %848 = vmatpush1.msra.mxu0 0.0
    %849 = vmatprep.subr.mxu0 0.0
    %850 = vmatpush1.msra.mxu0 0.0
    %851 = vmatprep.subr.mxu0 0.0
    %852 = vmatpush1.msra.mxu0 0.0
    %853 = vmatprep.subr.mxu0 0.0
    %854 = vmatpush1.msra.mxu0 0.0
    %855 = vmatprep.subr.mxu0 0.0
    %856 = vmatpush1.msra.mxu0 0.0
    %857 = vmatprep.subr.mxu0 0.0
    %858 = vmatpush1.msra.mxu0 0.0
    %859 = vmatprep.subr.mxu0 0.0
    %860 = vmatpush1.msra.mxu0 0.0
    %861 = vmatprep.subr.mxu0 0.0
    %862 = vmatpush1.msra.mxu0 0.0
    %863 = vmatprep.subr.mxu0 0.0
    %864 = vmatpush1.msra.mxu0 0.0
    %865 = vmatprep.subr.mxu0 0.0
    %866 = vmatpush1.msra.mxu0 0.0
    %867 = vmatprep.subr.mxu0 0.0
    %868 = vmatpush1.msra.mxu0 0.0
    %869 = vmatprep.subr.mxu0 0.0
    %870 = vmatpush1.msra.mxu0 0.0
    %871 = vmatprep.subr.mxu0 0.0
    %872 = vmatpush1.msra.mxu0 0.0
    %873 = vmatprep.subr.mxu0 0.0
    %874 = vmatpush1.msra.mxu0 0.0
    %875 = vmatprep.subr.mxu0 0.0
    %876 = vmatpush1.msra.mxu0 0.0
    %877 = vmatprep.subr.mxu0 0.0
    %878 = vmatpush1.msra.mxu0 0.0
    %879 = vmatprep.subr.mxu0 0.0
    %880 = vmatpush1.msra.mxu0 0.0
    %881 = vmatprep.subr.mxu0 0.0
    %882 = vmatpush1.msra.mxu0 0.0
    %883 = vmatprep.subr.mxu0 0.0
    %884 = vmatpush1.msra.mxu0 0.0
    %885 = vmatprep.subr.mxu0 0.0
    %886 = vmatpush1.msra.mxu0 0.0
    %887 = vmatprep.subr.mxu0 0.0
    %888 = vmatpush1.msra.mxu0 0.0
    %889 = vmatprep.subr.mxu0 0.0
    %890 = vmatpush1.msra.mxu0 0.0
    %891 = vmatprep.subr.mxu0 0.0
    %892 = vmatpush1.msra.mxu0 0.0
    %893 = vmatprep.subr.mxu0 0.0
    %894 = vmatpush1.msra.mxu0 0.0
    %895 = vmatprep.subr.mxu0 0.0
    %896 = vmatpush1.msra.mxu0 0.0
    %897 = vmatprep.subr.mxu0 0.0
    %898 = vmatpush1.msra.mxu0 0.0
    %899 = vmatprep.mubr.f32.mxu0 0.0
    %900 = vmatmul.mubr.f32.gmra.mrb[0].mxu0 %v833
    %v901 = vpop.f32.mrb[0].mxu0
    %v902 = vadd.f32 0.0, %v901
    %v903 = vpop.f32.mrb[0].mxu0
    %904 = vdwg.mxu0
    %v905 = vadd.f32 %v832, %v902
    %v906 = vtanh.pop %v905
    %v907 = vadd.f32 %v906, 1.0
    %v908 = vmul.f32 %v907, 0.5
    %v909 = vsel %vm219, %v906, %v908
    %v910 = vmul.f32 %v909, %v820
    %912 = vrot.lane.b32.xlu0 %v909, 64
    %v913 = vpop.permute.xlu0 %912
    %v915 = vmul.f32 %v909, %v913
    %917 = vrot.lane.b32.xlu0 %v915, 32
    %v918 = vpop.permute.xlu0 %917
    %v920 = vadd.f32 %v910, %v918
    %v921 = vtanh.pop %v920
    %923 = vrot.lane.b32.xlu0 %v921, 64
    %v924 = vpop.permute.xlu0 %923
    %v926 = vmul.f32 %v909, %v924
    %928 = vrot.lane.b32.xlu0 %v926, 32
    %v929 = vpop.permute.xlu0 %928
    %931 = vst.msk [vmem:[#allocation3 + $0x30] sm:$0xff] %vm227, %v929
    %v932 = vld [vmem:[#allocation2 + $0x38] sm:$0xff]
    %v933 = vsel %vm227, %v929, 0
    %935 = vmatprep.subr.mxu0 0.0
    %936 = vmatpush1.msra.mxu0 %v222
    %937 = vmatprep.subr.mxu0 0.0
    %938 = vmatpush1.msra.mxu0 %v223
    %939 = vmatprep.subr.mxu0 0.0
    %940 = vmatpush1.msra.mxu0 %v224
    %941 = vmatprep.subr.mxu0 0.0
    %942 = vmatpush1.msra.mxu0 %v225
    %943 = vmatprep.subr.mxu0 0.0
    %944 = vmatpush1.msra.mxu0 0.0
    %945 = vmatprep.subr.mxu0 0.0
    %946 = vmatpush1.msra.mxu0 0.0
    %947 = vmatprep.subr.mxu0 0.0
    %948 = vmatpush1.msra.mxu0 0.0
    %949 = vmatprep.subr.mxu0 0.0
    %950 = vmatpush1.msra.mxu0 0.0
    %951 = vmatprep.subr.mxu0 0.0
    %952 = vmatpush1.msra.mxu0 0.0
    %953 = vmatprep.subr.mxu0 0.0
    %954 = vmatpush1.msra.mxu0 0.0
    %955 = vmatprep.subr.mxu0 0.0
    %956 = vmatpush1.msra.mxu0 0.0
    %957 = vmatprep.subr.mxu0 0.0
    %958 = vmatpush1.msra.mxu0 0.0
    %959 = vmatprep.subr.mxu0 0.0
    %960 = vmatpush1.msra.mxu0 0.0
    %961 = vmatprep.subr.mxu0 0.0
    %962 = vmatpush1.msra.mxu0 0.0
    %963 = vmatprep.subr.mxu0 0.0
    %964 = vmatpush1.msra.mxu0 0.0
    %965 = vmatprep.subr.mxu0 0.0
    %966 = vmatpush1.msra.mxu0 0.0
    %967 = vmatprep.subr.mxu0 0.0
    %968 = vmatpush1.msra.mxu0 0.0
    %969 = vmatprep.subr.mxu0 0.0
    %970 = vmatpush1.msra.mxu0 0.0
    %971 = vmatprep.subr.mxu0 0.0
    %972 = vmatpush1.msra.mxu0 0.0
    %973 = vmatprep.subr.mxu0 0.0
    %974 = vmatpush1.msra.mxu0 0.0
    %975 = vmatprep.subr.mxu0 0.0
    %976 = vmatpush1.msra.mxu0 0.0
    %977 = vmatprep.subr.mxu0 0.0
    %978 = vmatpush1.msra.mxu0 0.0
    %979 = vmatprep.subr.mxu0 0.0
    %980 = vmatpush1.msra.mxu0 0.0
    %981 = vmatprep.subr.mxu0 0.0
    %982 = vmatpush1.msra.mxu0 0.0
    %983 = vmatprep.subr.mxu0 0.0
    %984 = vmatpush1.msra.mxu0 0.0
    %985 = vmatprep.subr.mxu0 0.0
    %986 = vmatpush1.msra.mxu0 0.0
    %987 = vmatprep.subr.mxu0 0.0
    %988 = vmatpush1.msra.mxu0 0.0
    %989 = vmatprep.subr.mxu0 0.0
    %990 = vmatpush1.msra.mxu0 0.0
    %991 = vmatprep.subr.mxu0 0.0
    %992 = vmatpush1.msra.mxu0 0.0
    %993 = vmatprep.subr.mxu0 0.0
    %994 = vmatpush1.msra.mxu0 0.0
    %995 = vmatprep.subr.mxu0 0.0
    %996 = vmatpush1.msra.mxu0 0.0
    %997 = vmatprep.subr.mxu0 0.0
    %998 = vmatpush1.msra.mxu0 0.0
    %999 = vmatprep.mubr.f32.mxu0 0.0
    %1000 = vmatmul.mubr.f32.gmra.mrb[0].mxu0 %v933
    %v1001 = vpop.f32.mrb[0].mxu0
    %v1002 = vadd.f32 0.0, %v1001
    %v1003 = vpop.f32.mrb[0].mxu0
    %1004 = vdwg.mxu0
    %v1005 = vadd.f32 %v932, %v1002
    %v1006 = vtanh.pop %v1005
    %v1007 = vadd.f32 %v1006, 1.0
    %v1008 = vmul.f32 %v1007, 0.5
    %v1009 = vsel %vm219, %v1006, %v1008
    %v1010 = vmul.f32 %v1009, %v920
    %1012 = vrot.lane.b32.xlu0 %v1009, 64
    %v1013 = vpop.permute.xlu0 %1012
    %v1015 = vmul.f32 %v1009, %v1013
    %1017 = vrot.lane.b32.xlu0 %v1015, 32
    %v1018 = vpop.permute.xlu0 %1017
    %v1020 = vadd.f32 %v1010, %v1018
    %v1021 = vtanh.pop %v1020
    %1023 = vrot.lane.b32.xlu0 %v1021, 64
    %v1024 = vpop.permute.xlu0 %1023
    %v1026 = vmul.f32 %v1009, %v1024
    %1028 = vrot.lane.b32.xlu0 %v1026, 32
    %v1029 = vpop.permute.xlu0 %1028
    %1031 = vst.msk [vmem:[#allocation3 + $0x38] sm:$0xff] %vm227, %v1029
    %1032 = vst.msk [vmem:[#allocation10] sm:$0xff] %vm227, %v1029
    %1034 = vrot.lane.b32.xlu0 %v1020, 96
    %v1035 = vpop.permute.xlu0 %1034
    %1037 = vst.msk [vmem:[#allocation12] sm:$0xff] %vm227, %v1035
    %v1038 = vld [vmem:[#allocation3] sm:$0xff]
    %v1039 = vld [vmem:[#allocation3 + $0x8] sm:$0xff]
    %v1040 = vld [vmem:[#allocation3 + $0x10] sm:$0xff]
    %v1041 = vld [vmem:[#allocation3 + $0x18] sm:$0xff]
    %v1042 = vld [vmem:[#allocation3 + $0x20] sm:$0xff]
    %v1043 = vld [vmem:[#allocation3 + $0x28] sm:$0xff]
    %v1044 = vld [vmem:[#allocation3 + $0x30] sm:$0xff]
    %v1045 = vld [vmem:[#allocation3 + $0x38] sm:$0xff]
    %v1046 = vld [vmem:[%s6] sm:$0xff]
    %v1047 = vld [vmem:[%s6 + $0x8] sm:$0xff]
    %v1048 = vld [vmem:[%s6 + $0x10] sm:$0xff]
    %v1049 = vld [vmem:[%s6 + $0x18] sm:$0xff]
    %v1051 = vsel %vm227, %v1038, 0
    %v1054 = vsel %vm227, %v1039, 0
    %v1057 = vsel %vm227, %v1040, 0
    %v1060 = vsel %vm227, %v1041, 0
    %v1063 = vsel %vm227, %v1042, 0
    %v1066 = vsel %vm227, %v1043, 0
    %v1069 = vsel %vm227, %v1044, 0
    %v1072 = vsel %vm227, %v1045, 0
    %1074 = vmatprep.subr.mxu0 0.0
    %1075 = vmatpush1.msra.mxu0 %v1046
    %1076 = vmatprep.subr.mxu0 0.0
    %1077 = vmatpush1.msra.mxu0 %v1047
    %1078 = vmatprep.subr.mxu0 0.0
    %1079 = vmatpush1.msra.mxu0 %v1048
    %1080 = vmatprep.subr.mxu0 0.0
    %1081 = vmatpush1.msra.mxu0 %v1049
    %1082 = vmatprep.subr.mxu0 0.0
    %1083 = vmatpush1.msra.mxu0 0.0
    %1084 = vmatprep.subr.mxu0 0.0
    %1085 = vmatpush1.msra.mxu0 0.0
    %1086 = vmatprep.subr.mxu0 0.0
    %1087 = vmatpush1.msra.mxu0 0.0
    %1088 = vmatprep.subr.mxu0 0.0
    %1089 = vmatpush1.msra.mxu0 0.0
    %1090 = vmatprep.subr.mxu0 0.0
    %1091 = vmatpush1.msra.mxu0 0.0
    %1092 = vmatprep.subr.mxu0 0.0
    %1093 = vmatpush1.msra.mxu0 0.0
    %1094 = vmatprep.subr.mxu0 0.0
    %1095 = vmatpush1.msra.mxu0 0.0
    %1096 = vmatprep.subr.mxu0 0.0
    %1097 = vmatpush1.msra.mxu0 0.0
    %1098 = vmatprep.subr.mxu0 0.0
    %1099 = vmatpush1.msra.mxu0 0.0
    %1100 = vmatprep.subr.mxu0 0.0
    %1101 = vmatpush1.msra.mxu0 0.0
    %1102 = vmatprep.subr.mxu0 0.0
    %1103 = vmatpush1.msra.mxu0 0.0
    %1104 = vmatprep.subr.mxu0 0.0
    %1105 = vmatpush1.msra.mxu0 0.0
    %1106 = vmatprep.subr.mxu0 0.0
    %1107 = vmatpush1.msra.mxu0 0.0
    %1108 = vmatprep.subr.mxu0 0.0
    %1109 = vmatpush1.msra.mxu0 0.0
    %1110 = vmatprep.subr.mxu0 0.0
    %1111 = vmatpush1.msra.mxu0 0.0
    %1112 = vmatprep.subr.mxu0 0.0
    %1113 = vmatpush1.msra.mxu0 0.0
    %1114 = vmatprep.subr.mxu0 0.0
    %1115 = vmatpush1.msra.mxu0 0.0
    %1116 = vmatprep.subr.mxu0 0.0
    %1117 = vmatpush1.msra.mxu0 0.0
    %1118 = vmatprep.subr.mxu0 0.0
    %1119 = vmatpush1.msra.mxu0 0.0
    %1120 = vmatprep.subr.mxu0 0.0
    %1121 = vmatpush1.msra.mxu0 0.0
    %1122 = vmatprep.subr.mxu0 0.0
    %1123 = vmatpush1.msra.mxu0 0.0
    %1124 = vmatprep.subr.mxu0 0.0
    %1125 = vmatpush1.msra.mxu0 0.0
    %1126 = vmatprep.subr.mxu0 0.0
    %1127 = vmatpush1.msra.mxu0 0.0
    %1128 = vmatprep.subr.mxu0 0.0
    %1129 = vmatpush1.msra.mxu0 0.0
    %1130 = vmatprep.subr.mxu0 0.0
    %1131 = vmatpush1.msra.mxu0 0.0
    %1132 = vmatprep.subr.mxu0 0.0
    %1133 = vmatpush1.msra.mxu0 0.0
    %1134 = vmatprep.subr.mxu0 0.0
    %1135 = vmatpush1.msra.mxu0 0.0
    %1136 = vmatprep.subr.mxu0 0.0
    %1137 = vmatpush1.msra.mxu0 0.0
    %1138 = vmatprep.mubr.f32.mxu0 0.0
    %1139 = vmatmul.mubr.f32.gmra.mrb[0].mxu0 %v1051
    %v1140 = vpop.f32.mrb[0].mxu0
    %v1141 = vadd.f32 0.0, %v1140
    %v1142 = vpop.f32.mrb[0].mxu0
    %1143 = vmatprep.mubr.f32.mxu0 0.0
    %1144 = vmatmul.mubr.f32.gmra.mrb[0].mxu0 %v1054
    %v1145 = vpop.f32.mrb[0].mxu0
    %v1146 = vadd.f32 0.0, %v1145
    %v1147 = vpop.f32.mrb[0].mxu0
    %1148 = vmatprep.mubr.f32.mxu0 0.0
    %1149 = vmatmul.mubr.f32.gmra.mrb[0].mxu0 %v1057
    %v1150 = vpop.f32.mrb[0].mxu0
    %v1151 = vadd.f32 0.0, %v1150
    %v1152 = vpop.f32.mrb[0].mxu0
    %1153 = vmatprep.mubr.f32.mxu0 0.0
    %1154 = vmatmul.mubr.f32.gmra.mrb[0].mxu0 %v1060
    %v1155 = vpop.f32.mrb[0].mxu0
    %v1156 = vadd.f32 0.0, %v1155
    %v1157 = vpop.f32.mrb[0].mxu0
    %1158 = vmatprep.mubr.f32.mxu0 0.0
    %1159 = vmatmul.mubr.f32.gmra.mrb[0].mxu0 %v1063
    %v1160 = vpop.f32.mrb[0].mxu0
    %v1161 = vadd.f32 0.0, %v1160
    %v1162 = vpop.f32.mrb[0].mxu0
    %1163 = vmatprep.mubr.f32.mxu0 0.0
    %1164 = vmatmul.mubr.f32.gmra.mrb[0].mxu0 %v1066
    %v1165 = vpop.f32.mrb[0].mxu0
    %v1166 = vadd.f32 0.0, %v1165
    %v1167 = vpop.f32.mrb[0].mxu0
    %1168 = vmatprep.mubr.f32.mxu0 0.0
    %1169 = vmatmul.mubr.f32.gmra.mrb[0].mxu0 %v1069
    %v1170 = vpop.f32.mrb[0].mxu0
    %v1171 = vadd.f32 0.0, %v1170
    %v1172 = vpop.f32.mrb[0].mxu0
    %1173 = vmatprep.mubr.f32.mxu0 0.0
    %1174 = vmatmul.mubr.f32.gmra.mrb[0].mxu0 %v1072
    %v1175 = vpop.f32.mrb[0].mxu0
    %v1176 = vadd.f32 0.0, %v1175
    %v1177 = vpop.f32.mrb[0].mxu0
    %1178 = vdwg.mxu0
    %1179 = vst [vmem:[#allocation9] sm:$0xff] %v1141
    %1180 = vst [vmem:[#allocation9 + $0x8] sm:$0xff] %v1146
    %1181 = vst [vmem:[#allocation9 + $0x10] sm:$0xff] %v1151
    %1182 = vst [vmem:[#allocation9 + $0x18] sm:$0xff] %v1156
    %1183 = vst [vmem:[#allocation9 + $0x20] sm:$0xff] %v1161
    %1184 = vst [vmem:[#allocation9 + $0x28] sm:$0xff] %v1166
    %1185 = vst [vmem:[#allocation9 + $0x30] sm:$0xff] %v1171
    %1186 = vst [vmem:[#allocation9 + $0x38] sm:$0xff] %v1176
    // Predicated region
    $region38: #{tpu_custom_call.1} parent=1 // pred_check
      _
    $region39: #{tpu_custom_call.1} parent=1 // pred_check_branch
      %1188 = sbr.rel (0) target = $region41
    $region40: #{tpu_custom_call.1} parent=1 // pred_region
      %s1190 = ssub.s32 1024, 1024
      %1191 = vsyncadd [#allocation6], %s1190
      %s1192 = sshll.u32 [#allocation9], 4
      %s1193 = int_to_ptr.vmem [resolvable:$true] %s1192
      %1198 = dma.vmem_to_hbm [thread:$0]  %s1193, 1024, %s7, [#allocation6], 128, 128, 8
    $region41: #{tpu_custom_call.1} parent=1 // pred_fallthru
      _
    // Predicated region
    $region42: #{tpu_custom_call.1} parent=1 // pred_check
      _
    $region43: #{tpu_custom_call.1} parent=1 // pred_check_branch
      %1200 = sbr.rel (0) target = $region45
    $region44: #{tpu_custom_call.1} parent=1 // pred_region
      %s1202 = ssub.s32 128, 128
      %1203 = vsyncadd [#allocation11], %s1202
      %s1205 = sshll.u32 [#allocation10], 4
      %s1206 = int_to_ptr.vmem [resolvable:$true] %s1205
      %1208 = dma.vmem_to_hbm [thread:$0]  %s1206, 128, %s8, [#allocation11]
    $region45: #{tpu_custom_call.1} parent=1 // pred_fallthru
      _
    // Predicated region
    $region46: #{tpu_custom_call.1} parent=1 // pred_check
      _
    $region47: #{tpu_custom_call.1} parent=1 // pred_check_branch
      %1210 = sbr.rel (0) target = $region49
    $region48: #{tpu_custom_call.1} parent=1 // pred_region
      %s1212 = ssub.s32 128, 128
      %1213 = vsyncadd [#allocation11], %s1212
      %s1215 = sshll.u32 [#allocation12], 4
      %s1216 = int_to_ptr.vmem [resolvable:$true] %s1215
      %1218 = dma.vmem_to_hbm [thread:$0]  %s1216, 128, %s9, [#allocation11]
    $region49: #{tpu_custom_call.1} parent=1 // pred_fallthru
      _
    // Predicated region
    $region50: #{tpu_custom_call.1} parent=1 // pred_check
      _
    $region51: #{tpu_custom_call.1} parent=1 // pred_check_branch
      %1220 = sbr.rel (0) target = $region53
    $region52: #{tpu_custom_call.1} parent=1 // pred_region
      %1221 = dma.done [#allocation6], 1024
    $region53: #{tpu_custom_call.1} parent=1 // pred_fallthru
      _
    // Predicated region
    $region54: #{tpu_custom_call.1} parent=1 // pred_check
      _
    $region55: #{tpu_custom_call.1} parent=1 // pred_check_branch
      %1223 = sbr.rel (0) target = $region57
    $region56: #{tpu_custom_call.1} parent=1 // pred_region
      %1224 = dma.done [#allocation11], 128
    $region57: #{tpu_custom_call.1} parent=1 // pred_fallthru
      _
    // Predicated region
    $region58: #{tpu_custom_call.1} parent=1 // pred_check
      _
    $region59: #{tpu_custom_call.1} parent=1 // pred_check_branch
      %1226 = sbr.rel (0) target = $region61
    $region60: #{tpu_custom_call.1} parent=1 // pred_region
      %1227 = dma.done [#allocation11], 128
    $region61: #{tpu_custom_call.1} parent=1 // pred_fallthru
      _
    %1228 = vsyncpa [#allocation5], 1
    %1229 = vsyncpa [#allocation8], 1
    %1230 = vsyncpa [#allocation6], 1
    %1231 = vsyncpa [#allocation11], 1

</llo_original>
